<compile_context>
chip_gen: v7x
topology: tpu7x:2x2x1
jax: 0.10.0
libtpu: 0.0.40
codegen_flags: <defaults>
</compile_context>

<pallas_src>
import functools

import jax
import jax.numpy as jnp
from jax.experimental import pallas as pl
from jax.experimental.pallas import tpu as pltpu

HIDDEN = 64  # self.hidden_space in the PyTorch module


def _ceil8(n):
    return ((n + 7) // 8) * 8


def _pack_layout(state_space):
    """Row offsets of each parameter inside the single packed (rows, 4H) array.

    Every section starts on an 8-row (sublane-tile) boundary so all in-kernel
    static ref slices are tile-aligned.
    """
    H = HIDDEN
    r_b1 = _ceil8(state_space)
    r_wih = r_b1 + 8
    r_whh = r_wih + H
    r_bg = r_whh + H
    r_w2 = r_bg + 8
    r_b2 = r_w2 + H
    rows = r_b2 + 8
    return {"b1": r_b1, "wih": r_wih, "whh": r_whh, "bg": r_bg,
            "w2": r_w2, "b2": r_b2, "rows": rows}


def prepack_params(params):
    """One-time packing of all weights/biases into a single (rows, 4H) f32 array.

    One array -> one HBM->VMEM DMA per call instead of 7+ tiny ones (the kernel
    is latency/overhead bound).  Transposes and the b_ih + b_hh fusion happen
    here, outside the per-call jit path.
    NOTE(perf): on v6e/v7x the matmul weights could additionally be cast to
    bf16 here (halves weight DMA, native MXU dtype); kept f32 so the 1e-4
    reference check holds exactly through the T-step recurrence.
    """
    H = HIDDEN
    w1t = jnp.asarray(params["w1"], jnp.float32).T          # (S, H)
    S = w1t.shape[0]
    w2t = jnp.asarray(params["w2"], jnp.float32).T          # (H, A)
    A = w2t.shape[1]
    L = _pack_layout(S)

    wpack = jnp.zeros((L["rows"], 4 * H), jnp.float32)
    wpack = wpack.at[0:S, 0:H].set(w1t)
    wpack = wpack.at[L["b1"], 0:H].set(jnp.asarray(params["b1"], jnp.float32))
    wpack = wpack.at[L["wih"]:L["wih"] + H, :].set(
        jnp.asarray(params["w_ih"], jnp.float32).T)
    wpack = wpack.at[L["whh"]:L["whh"] + H, :].set(
        jnp.asarray(params["w_hh"], jnp.float32).T)
    wpack = wpack.at[L["bg"], :].set(
        jnp.asarray(params["b_ih"], jnp.float32) + jnp.asarray(params["b_hh"], jnp.float32))
    wpack = wpack.at[L["w2"]:L["w2"] + H, 0:A].set(w2t)
    wpack = wpack.at[L["b2"], 0:A].set(jnp.asarray(params["b2"], jnp.float32))
    return wpack


def _qnet_kernel(x_ref, w_ref, h0_ref, c0_ref, y_ref, hout_ref, cout_ref):
    H = HIDDEN
    TB, S = x_ref.shape                 # time-major: row = t*B + b
    B = h0_ref.shape[1]
    T = TB // B
    A = y_ref.shape[1]
    L = _pack_layout(S)

    # ---- Batched non-recurrent math (hoisted out of the recurrence) --------
    # Linear1 + ReLU for ALL timesteps as one matmul.
    x = x_ref[...]                                                   # (T*B, S)
    w1 = w_ref[0:S, 0:H]
    b1 = w_ref[L["b1"]:L["b1"] + 1, 0:H]
    z = jnp.maximum(jnp.dot(x, w1, preferred_element_type=jnp.float32) + b1, 0.0)

    # Input-path gate pre-activation for ALL timesteps at once; both LSTM
    # biases (b_ih + b_hh) were fused into one row at pack time.
    wih = w_ref[L["wih"]:L["wih"] + H, :]
    bg = w_ref[L["bg"]:L["bg"] + 1, :]
    gin = jnp.dot(z, wih, preferred_element_type=jnp.float32) + bg   # (T*B, 4H)

    whh = w_ref[L["whh"]:L["whh"] + H, :]       # loaded once, loop-invariant RHS
    h = h0_ref[0]                               # (B, H)
    c = c0_ref[0]                               # (B, H)

    # ---- Recurrence: fully unrolled; only h @ W_hh + gate math per step ----
    # PyTorch gate order: i, f, g, o.  i|f span one full 128-lane tile so a
    # single sigmoid covers both without lane-misaligned slicing.
    hs = []
    for t in range(T):
        gates = gin[t * B:(t + 1) * B, :] + jnp.dot(
            h, whh, preferred_element_type=jnp.float32)              # (B, 4H)
        s_if = jax.nn.sigmoid(gates[:, 0:2 * H])
        i_g = s_if[:, 0:H]
        f_g = s_if[:, H:2 * H]
        g_g = jnp.tanh(gates[:, 2 * H:3 * H])
        o_g = jax.nn.sigmoid(gates[:, 3 * H:4 * H])
        c = f_g * c + i_g * g_g
        h = o_g * jnp.tanh(c)
        hs.append(h)                           # stays in vregs (no VMEM scratch)

    # ---- Batched Linear2 over all timesteps + single stores ----------------
    hs_all = jnp.concatenate(hs, axis=0)       # (T*B, H), time-major
    w2 = w_ref[L["w2"]:L["w2"] + H, 0:A]
    b2 = w_ref[L["b2"]:L["b2"] + 1, 0:A]
    y = jnp.dot(hs_all, w2, preferred_element_type=jnp.float32) + b2
    y_ref[...] = y.astype(y_ref.dtype)         # (T*B, A): one small masked store

    # Final hidden / cell state written exactly once.
    hout_ref[0] = h.astype(hout_ref.dtype)
    cout_ref[0] = c.astype(cout_ref.dtype)


def qnet_forward(wpack, x, h, c, *, action_space):
    """x: (B,T,S) f32, h/c: (1,B,H) f32 -> (y (B,T,A), new_h (1,B,H), new_c (1,B,H))."""
    B, T, S = x.shape
    H = HIDDEN
    A = action_space

    # Time-major ordering: each recurrence step then reads a contiguous (B,4H)
    # sublane block.  The (B,T,*) <-> (T,B,*) transposes are on tiny tensors.
    x_tm = jnp.transpose(x, (1, 0, 2)).reshape(T * B, S)

    vmem = pl.BlockSpec(memory_space=pltpu.MemorySpace.VMEM)
    y_tm, new_h, new_c = pl.pallas_call(
        _qnet_kernel,
        out_shape=(
            jax.ShapeDtypeStruct((T * B, A), jnp.float32),
            jax.ShapeDtypeStruct((1, B, H), jnp.float32),
            jax.ShapeDtypeStruct((1, B, H), jnp.float32),
        ),
        in_specs=[vmem, vmem, vmem, vmem],
        out_specs=(vmem, vmem, vmem),
    )(x_tm, wpack, h, c)
    # NOTE(perf): for large production batches add a batch-parallel grid axis
    # (dimension_semantics=("parallel",)) so both v7x TensorCores share work;
    # at B=2 a gridless single call is lowest latency.

    y = y_tm.reshape(T, B, A).transpose(1, 0, 2)
    return y, new_h, new_c


def _ref_forward(params, x, h, c):
    """Pure-JAX reference (matches PyTorch Linear/LSTM semantics)."""
    H = HIDDEN
    z = jax.nn.relu(jnp.einsum("bts,hs->bth", x, params["w1"]) + params["b1"])
    h_t, c_t = h[0], c[0]
    ys = []
    for t in range(x.shape[1]):
        g = (z[:, t] @ params["w_ih"].T + params["b_ih"]
             + h_t @ params["w_hh"].T + params["b_hh"])
        i = jax.nn.sigmoid(g[:, 0 * H:1 * H])
        f = jax.nn.sigmoid(g[:, 1 * H:2 * H])
        gg = jnp.tanh(g[:, 2 * H:3 * H])
        o = jax.nn.sigmoid(g[:, 3 * H:4 * H])
        c_t = f * c_t + i * gg
        h_t = o * jnp.tanh(c_t)
        ys.append(h_t @ params["w2"].T + params["b2"])
    y = jnp.stack(ys, axis=1)
    return y, h_t[None], c_t[None]


def init_params(key, state_space, action_space):
    H = HIDDEN
    ks = jax.random.split(key, 8)
    u = lambda k, shape, bound: jax.random.uniform(k, shape, jnp.float32, -bound, bound)
    s1 = 1.0 / jnp.sqrt(state_space)
    sh = 1.0 / jnp.sqrt(H)
    return {
        "w1": u(ks[0], (H, state_space), s1),
        "b1": u(ks[1], (H,), s1),
        "w_ih": u(ks[2], (4 * H, H), sh),
        "b_ih": u(ks[3], (4 * H,), sh),
        "w_hh": u(ks[4], (4 * H, H), sh),
        "b_hh": u(ks[5], (4 * H,), sh),
        "w2": u(ks[6], (action_space, H), sh),
        "b2": u(ks[7], (action_space,), sh),
    }


if __name__ == "__main__":
    B, T = 2, 8
    state_space, action_space = 4, 2

    key = jax.random.PRNGKey(0)
    kp, kx, kh, kc = jax.random.split(key, 4)
    params = init_params(kp, state_space, action_space)
    wpack = prepack_params(params)          # packed once, outside the jit path

    x = jax.random.normal(kx, (B, T, state_space), jnp.float32)
    h = jax.random.normal(kh, (1, B, HIDDEN), jnp.float32) * 0.1
    c = jax.random.normal(kc, (1, B, HIDDEN), jnp.float32) * 0.1

    fwd = jax.jit(functools.partial(qnet_forward, action_space=action_space))
    y, new_h, new_c = fwd(wpack, x, h, c)
    jax.block_until_ready((y, new_h, new_c))

    y_r, h_r, c_r = _ref_forward(params, x, h, c)
    assert y.shape == (B, T, action_space)
    assert new_h.shape == (1, B, HIDDEN) and new_c.shape == (1, B, HIDDEN)
    assert jnp.allclose(y, y_r, atol=1e-4), "output mismatch vs reference"
    assert jnp.allclose(new_h, h_r, atol=1e-4), "hidden state mismatch"
    assert jnp.allclose(new_c, c_r, atol=1e-4), "cell state mismatch"

    print("KERNEL_OK")
</pallas_src>

<mosaic_0001>
module attributes {stable_mosaic.version = 11 : i64} {
  func.func @_qnet_kernel(%arg0: memref<16x4xf32, #tpu.memory_space<vmem>>, %arg1: memref<224x256xf32, #tpu.memory_space<vmem>>, %arg2: memref<1x2x64xf32, #tpu.memory_space<vmem>>, %arg3: memref<1x2x64xf32, #tpu.memory_space<vmem>>, %arg4: memref<16x2xf32, #tpu.memory_space<vmem>>, %arg5: memref<1x2x64xf32, #tpu.memory_space<vmem>>, %arg6: memref<1x2x64xf32, #tpu.memory_space<vmem>>) attributes {dimension_semantics = [], scalar_prefetch = 0 : i64, scratch_operands = 0 : i64, tpu.core_type = #tpu.core_type<tc>} {
    %c0 = arith.constant 0 : index
    %c0_0 = arith.constant 0 : index
    %0 = vector.load %arg0[%c0, %c0_0] : memref<16x4xf32, #tpu.memory_space<vmem>>, vector<16x4xf32>
    %c0_1 = arith.constant 0 : index
    %c0_2 = arith.constant 0 : index
    %1 = vector.load %arg1[%c0_1, %c0_2] : memref<224x256xf32, #tpu.memory_space<vmem>>, vector<4x64xf32>
    %c8 = arith.constant 8 : index
    %c0_3 = arith.constant 0 : index
    %2 = vector.load %arg1[%c8, %c0_3] : memref<224x256xf32, #tpu.memory_space<vmem>>, vector<1x64xf32>
    %cst = arith.constant dense<0.000000e+00> : vector<16x64xf32>
    %3 = tpu.matmul %0, %1, %cst {dimension_numbers = #tpu.dot_dimension_numbers<[1], [0], [0], [1], [0, 0, 1, 1], [], []>} : vector<16x4xf32>, vector<4x64xf32>, vector<16x64xf32> -> vector<16x64xf32>
    %4 = vector.broadcast %2 : vector<1x64xf32> to vector<16x64xf32>
    %5 = arith.addf %3, %4 : vector<16x64xf32>
    %cst_4 = arith.constant 0.000000e+00 : f32
    %6 = vector.broadcast %cst_4 : f32 to vector<16x64xf32>
    %7 = arith.maximumf %5, %6 : vector<16x64xf32>
    %c16 = arith.constant 16 : index
    %c0_5 = arith.constant 0 : index
    %8 = vector.load %arg1[%c16, %c0_5] : memref<224x256xf32, #tpu.memory_space<vmem>>, vector<64x256xf32>
    %c144 = arith.constant 144 : index
    %c0_6 = arith.constant 0 : index
    %9 = vector.load %arg1[%c144, %c0_6] : memref<224x256xf32, #tpu.memory_space<vmem>>, vector<1x256xf32>
    %cst_7 = arith.constant dense<0.000000e+00> : vector<16x256xf32>
    %10 = tpu.matmul %7, %8, %cst_7 {dimension_numbers = #tpu.dot_dimension_numbers<[1], [0], [0], [1], [0, 0, 1, 1], [], []>} : vector<16x64xf32>, vector<64x256xf32>, vector<16x256xf32> -> vector<16x256xf32>
    %11 = vector.broadcast %9 : vector<1x256xf32> to vector<16x256xf32>
    %12 = arith.addf %10, %11 : vector<16x256xf32>
    %c80 = arith.constant 80 : index
    %c0_8 = arith.constant 0 : index
    %13 = vector.load %arg1[%c80, %c0_8] : memref<224x256xf32, #tpu.memory_space<vmem>>, vector<64x256xf32>
    %c0_9 = arith.constant 0 : index
    %c0_10 = arith.constant 0 : index
    %c0_11 = arith.constant 0 : index
    %14 = vector.load %arg2[%c0_9, %c0_10, %c0_11] : memref<1x2x64xf32, #tpu.memory_space<vmem>>, vector<1x2x64xf32>
    %15 = vector.shape_cast %14 : vector<1x2x64xf32> to vector<2x64xf32>
    %c0_12 = arith.constant 0 : index
    %c0_13 = arith.constant 0 : index
    %c0_14 = arith.constant 0 : index
    %16 = vector.load %arg3[%c0_12, %c0_13, %c0_14] : memref<1x2x64xf32, #tpu.memory_space<vmem>>, vector<1x2x64xf32>
    %17 = vector.shape_cast %16 : vector<1x2x64xf32> to vector<2x64xf32>
    %18 = vector.extract_strided_slice %12 {offsets = [0, 0], sizes = [2, 256], strides = [1, 1]} : vector<16x256xf32> to vector<2x256xf32>
    %cst_15 = arith.constant dense<0.000000e+00> : vector<2x256xf32>
    %19 = tpu.matmul %15, %13, %cst_15 {dimension_numbers = #tpu.dot_dimension_numbers<[1], [0], [0], [1], [0, 0, 1, 1], [], []>} : vector<2x64xf32>, vector<64x256xf32>, vector<2x256xf32> -> vector<2x256xf32>
    %20 = arith.addf %18, %19 : vector<2x256xf32>
    %21 = vector.extract_strided_slice %20 {offsets = [0, 0], sizes = [2, 128], strides = [1, 1]} : vector<2x256xf32> to vector<2x128xf32>
    %22 = arith.negf %21 : vector<2x128xf32>
    %23 = math.exp %22 : vector<2x128xf32>
    %cst_16 = arith.constant 1.000000e+00 : f32
    %24 = vector.broadcast %cst_16 : f32 to vector<2x128xf32>
    %25 = arith.addf %24, %23 : vector<2x128xf32>
    %26 = arith.divf %24, %25 : vector<2x128xf32>
    %27 = vector.extract_strided_slice %26 {offsets = [0, 0], sizes = [2, 64], strides = [1, 1]} : vector<2x128xf32> to vector<2x64xf32>
    %28 = vector.extract_strided_slice %26 {offsets = [0, 64], sizes = [2, 64], strides = [1, 1]} : vector<2x128xf32> to vector<2x64xf32>
    %29 = vector.extract_strided_slice %20 {offsets = [0, 128], sizes = [2, 64], strides = [1, 1]} : vector<2x256xf32> to vector<2x64xf32>
    %30 = math.tanh %29 : vector<2x64xf32>
    %31 = vector.extract_strided_slice %20 {offsets = [0, 192], sizes = [2, 64], strides = [1, 1]} : vector<2x256xf32> to vector<2x64xf32>
    %32 = arith.negf %31 : vector<2x64xf32>
    %33 = math.exp %32 : vector<2x64xf32>
    %cst_17 = arith.constant 1.000000e+00 : f32
    %34 = vector.broadcast %cst_17 : f32 to vector<2x64xf32>
    %35 = arith.addf %34, %33 : vector<2x64xf32>
    %36 = arith.divf %34, %35 : vector<2x64xf32>
    %37 = arith.mulf %28, %17 : vector<2x64xf32>
    %38 = arith.mulf %27, %30 : vector<2x64xf32>
    %39 = arith.addf %37, %38 : vector<2x64xf32>
    %40 = math.tanh %39 : vector<2x64xf32>
    %41 = arith.mulf %36, %40 : vector<2x64xf32>
    %42 = vector.extract_strided_slice %12 {offsets = [2, 0], sizes = [2, 256], strides = [1, 1]} : vector<16x256xf32> to vector<2x256xf32>
    %cst_18 = arith.constant dense<0.000000e+00> : vector<2x256xf32>
    %43 = tpu.matmul %41, %13, %cst_18 {dimension_numbers = #tpu.dot_dimension_numbers<[1], [0], [0], [1], [0, 0, 1, 1], [], []>} : vector<2x64xf32>, vector<64x256xf32>, vector<2x256xf32> -> vector<2x256xf32>
    %44 = arith.addf %42, %43 : vector<2x256xf32>
    %45 = vector.extract_strided_slice %44 {offsets = [0, 0], sizes = [2, 128], strides = [1, 1]} : vector<2x256xf32> to vector<2x128xf32>
    %46 = arith.negf %45 : vector<2x128xf32>
    %47 = math.exp %46 : vector<2x128xf32>
    %cst_19 = arith.constant 1.000000e+00 : f32
    %48 = vector.broadcast %cst_19 : f32 to vector<2x128xf32>
    %49 = arith.addf %48, %47 : vector<2x128xf32>
    %50 = arith.divf %48, %49 : vector<2x128xf32>
    %51 = vector.extract_strided_slice %50 {offsets = [0, 0], sizes = [2, 64], strides = [1, 1]} : vector<2x128xf32> to vector<2x64xf32>
    %52 = vector.extract_strided_slice %50 {offsets = [0, 64], sizes = [2, 64], strides = [1, 1]} : vector<2x128xf32> to vector<2x64xf32>
    %53 = vector.extract_strided_slice %44 {offsets = [0, 128], sizes = [2, 64], strides = [1, 1]} : vector<2x256xf32> to vector<2x64xf32>
    %54 = math.tanh %53 : vector<2x64xf32>
    %55 = vector.extract_strided_slice %44 {offsets = [0, 192], sizes = [2, 64], strides = [1, 1]} : vector<2x256xf32> to vector<2x64xf32>
    %56 = arith.negf %55 : vector<2x64xf32>
    %57 = math.exp %56 : vector<2x64xf32>
    %cst_20 = arith.constant 1.000000e+00 : f32
    %58 = vector.broadcast %cst_20 : f32 to vector<2x64xf32>
    %59 = arith.addf %58, %57 : vector<2x64xf32>
    %60 = arith.divf %58, %59 : vector<2x64xf32>
    %61 = arith.mulf %52, %39 : vector<2x64xf32>
    %62 = arith.mulf %51, %54 : vector<2x64xf32>
    %63 = arith.addf %61, %62 : vector<2x64xf32>
    %64 = math.tanh %63 : vector<2x64xf32>
    %65 = arith.mulf %60, %64 : vector<2x64xf32>
    %66 = vector.extract_strided_slice %12 {offsets = [4, 0], sizes = [2, 256], strides = [1, 1]} : vector<16x256xf32> to vector<2x256xf32>
    %cst_21 = arith.constant dense<0.000000e+00> : vector<2x256xf32>
    %67 = tpu.matmul %65, %13, %cst_21 {dimension_numbers = #tpu.dot_dimension_numbers<[1], [0], [0], [1], [0, 0, 1, 1], [], []>} : vector<2x64xf32>, vector<64x256xf32>, vector<2x256xf32> -> vector<2x256xf32>
    %68 = arith.addf %66, %67 : vector<2x256xf32>
    %69 = vector.extract_strided_slice %68 {offsets = [0, 0], sizes = [2, 128], strides = [1, 1]} : vector<2x256xf32> to vector<2x128xf32>
    %70 = arith.negf %69 : vector<2x128xf32>
    %71 = math.exp %70 : vector<2x128xf32>
    %cst_22 = arith.constant 1.000000e+00 : f32
    %72 = vector.broadcast %cst_22 : f32 to vector<2x128xf32>
    %73 = arith.addf %72, %71 : vector<2x128xf32>
    %74 = arith.divf %72, %73 : vector<2x128xf32>
    %75 = vector.extract_strided_slice %74 {offsets = [0, 0], sizes = [2, 64], strides = [1, 1]} : vector<2x128xf32> to vector<2x64xf32>
    %76 = vector.extract_strided_slice %74 {offsets = [0, 64], sizes = [2, 64], strides = [1, 1]} : vector<2x128xf32> to vector<2x64xf32>
    %77 = vector.extract_strided_slice %68 {offsets = [0, 128], sizes = [2, 64], strides = [1, 1]} : vector<2x256xf32> to vector<2x64xf32>
    %78 = math.tanh %77 : vector<2x64xf32>
    %79 = vector.extract_strided_slice %68 {offsets = [0, 192], sizes = [2, 64], strides = [1, 1]} : vector<2x256xf32> to vector<2x64xf32>
    %80 = arith.negf %79 : vector<2x64xf32>
    %81 = math.exp %80 : vector<2x64xf32>
    %cst_23 = arith.constant 1.000000e+00 : f32
    %82 = vector.broadcast %cst_23 : f32 to vector<2x64xf32>
    %83 = arith.addf %82, %81 : vector<2x64xf32>
    %84 = arith.divf %82, %83 : vector<2x64xf32>
    %85 = arith.mulf %76, %63 : vector<2x64xf32>
    %86 = arith.mulf %75, %78 : vector<2x64xf32>
    %87 = arith.addf %85, %86 : vector<2x64xf32>
    %88 = math.tanh %87 : vector<2x64xf32>
    %89 = arith.mulf %84, %88 : vector<2x64xf32>
    %90 = vector.extract_strided_slice %12 {offsets = [6, 0], sizes = [2, 256], strides = [1, 1]} : vector<16x256xf32> to vector<2x256xf32>
    %cst_24 = arith.constant dense<0.000000e+00> : vector<2x256xf32>
    %91 = tpu.matmul %89, %13, %cst_24 {dimension_numbers = #tpu.dot_dimension_numbers<[1], [0], [0], [1], [0, 0, 1, 1], [], []>} : vector<2x64xf32>, vector<64x256xf32>, vector<2x256xf32> -> vector<2x256xf32>
    %92 = arith.addf %90, %91 : vector<2x256xf32>
    %93 = vector.extract_strided_slice %92 {offsets = [0, 0], sizes = [2, 128], strides = [1, 1]} : vector<2x256xf32> to vector<2x128xf32>
    %94 = arith.negf %93 : vector<2x128xf32>
    %95 = math.exp %94 : vector<2x128xf32>
    %cst_25 = arith.constant 1.000000e+00 : f32
    %96 = vector.broadcast %cst_25 : f32 to vector<2x128xf32>
    %97 = arith.addf %96, %95 : vector<2x128xf32>
    %98 = arith.divf %96, %97 : vector<2x128xf32>
    %99 = vector.extract_strided_slice %98 {offsets = [0, 0], sizes = [2, 64], strides = [1, 1]} : vector<2x128xf32> to vector<2x64xf32>
    %100 = vector.extract_strided_slice %98 {offsets = [0, 64], sizes = [2, 64], strides = [1, 1]} : vector<2x128xf32> to vector<2x64xf32>
    %101 = vector.extract_strided_slice %92 {offsets = [0, 128], sizes = [2, 64], strides = [1, 1]} : vector<2x256xf32> to vector<2x64xf32>
    %102 = math.tanh %101 : vector<2x64xf32>
    %103 = vector.extract_strided_slice %92 {offsets = [0, 192], sizes = [2, 64], strides = [1, 1]} : vector<2x256xf32> to vector<2x64xf32>
    %104 = arith.negf %103 : vector<2x64xf32>
    %105 = math.exp %104 : vector<2x64xf32>
    %cst_26 = arith.constant 1.000000e+00 : f32
    %106 = vector.broadcast %cst_26 : f32 to vector<2x64xf32>
    %107 = arith.addf %106, %105 : vector<2x64xf32>
    %108 = arith.divf %106, %107 : vector<2x64xf32>
    %109 = arith.mulf %100, %87 : vector<2x64xf32>
    %110 = arith.mulf %99, %102 : vector<2x64xf32>
    %111 = arith.addf %109, %110 : vector<2x64xf32>
    %112 = math.tanh %111 : vector<2x64xf32>
    %113 = arith.mulf %108, %112 : vector<2x64xf32>
    %114 = vector.extract_strided_slice %12 {offsets = [8, 0], sizes = [2, 256], strides = [1, 1]} : vector<16x256xf32> to vector<2x256xf32>
    %cst_27 = arith.constant dense<0.000000e+00> : vector<2x256xf32>
    %115 = tpu.matmul %113, %13, %cst_27 {dimension_numbers = #tpu.dot_dimension_numbers<[1], [0], [0], [1], [0, 0, 1, 1], [], []>} : vector<2x64xf32>, vector<64x256xf32>, vector<2x256xf32> -> vector<2x256xf32>
    %116 = arith.addf %114, %115 : vector<2x256xf32>
    %117 = vector.extract_strided_slice %116 {offsets = [0, 0], sizes = [2, 128], strides = [1, 1]} : vector<2x256xf32> to vector<2x128xf32>
    %118 = arith.negf %117 : vector<2x128xf32>
    %119 = math.exp %118 : vector<2x128xf32>
    %cst_28 = arith.constant 1.000000e+00 : f32
    %120 = vector.broadcast %cst_28 : f32 to vector<2x128xf32>
    %121 = arith.addf %120, %119 : vector<2x128xf32>
    %122 = arith.divf %120, %121 : vector<2x128xf32>
    %123 = vector.extract_strided_slice %122 {offsets = [0, 0], sizes = [2, 64], strides = [1, 1]} : vector<2x128xf32> to vector<2x64xf32>
    %124 = vector.extract_strided_slice %122 {offsets = [0, 64], sizes = [2, 64], strides = [1, 1]} : vector<2x128xf32> to vector<2x64xf32>
    %125 = vector.extract_strided_slice %116 {offsets = [0, 128], sizes = [2, 64], strides = [1, 1]} : vector<2x256xf32> to vector<2x64xf32>
    %126 = math.tanh %125 : vector<2x64xf32>
    %127 = vector.extract_strided_slice %116 {offsets = [0, 192], sizes = [2, 64], strides = [1, 1]} : vector<2x256xf32> to vector<2x64xf32>
    %128 = arith.negf %127 : vector<2x64xf32>
    %129 = math.exp %128 : vector<2x64xf32>
    %cst_29 = arith.constant 1.000000e+00 : f32
    %130 = vector.broadcast %cst_29 : f32 to vector<2x64xf32>
    %131 = arith.addf %130, %129 : vector<2x64xf32>
    %132 = arith.divf %130, %131 : vector<2x64xf32>
    %133 = arith.mulf %124, %111 : vector<2x64xf32>
    %134 = arith.mulf %123, %126 : vector<2x64xf32>
    %135 = arith.addf %133, %134 : vector<2x64xf32>
    %136 = math.tanh %135 : vector<2x64xf32>
    %137 = arith.mulf %132, %136 : vector<2x64xf32>
    %138 = vector.extract_strided_slice %12 {offsets = [10, 0], sizes = [2, 256], strides = [1, 1]} : vector<16x256xf32> to vector<2x256xf32>
    %cst_30 = arith.constant dense<0.000000e+00> : vector<2x256xf32>
    %139 = tpu.matmul %137, %13, %cst_30 {dimension_numbers = #tpu.dot_dimension_numbers<[1], [0], [0], [1], [0, 0, 1, 1], [], []>} : vector<2x64xf32>, vector<64x256xf32>, vector<2x256xf32> -> vector<2x256xf32>
    %140 = arith.addf %138, %139 : vector<2x256xf32>
    %141 = vector.extract_strided_slice %140 {offsets = [0, 0], sizes = [2, 128], strides = [1, 1]} : vector<2x256xf32> to vector<2x128xf32>
    %142 = arith.negf %141 : vector<2x128xf32>
    %143 = math.exp %142 : vector<2x128xf32>
    %cst_31 = arith.constant 1.000000e+00 : f32
    %144 = vector.broadcast %cst_31 : f32 to vector<2x128xf32>
    %145 = arith.addf %144, %143 : vector<2x128xf32>
    %146 = arith.divf %144, %145 : vector<2x128xf32>
    %147 = vector.extract_strided_slice %146 {offsets = [0, 0], sizes = [2, 64], strides = [1, 1]} : vector<2x128xf32> to vector<2x64xf32>
    %148 = vector.extract_strided_slice %146 {offsets = [0, 64], sizes = [2, 64], strides = [1, 1]} : vector<2x128xf32> to vector<2x64xf32>
    %149 = vector.extract_strided_slice %140 {offsets = [0, 128], sizes = [2, 64], strides = [1, 1]} : vector<2x256xf32> to vector<2x64xf32>
    %150 = math.tanh %149 : vector<2x64xf32>
    %151 = vector.extract_strided_slice %140 {offsets = [0, 192], sizes = [2, 64], strides = [1, 1]} : vector<2x256xf32> to vector<2x64xf32>
    %152 = arith.negf %151 : vector<2x64xf32>
    %153 = math.exp %152 : vector<2x64xf32>
    %cst_32 = arith.constant 1.000000e+00 : f32
    %154 = vector.broadcast %cst_32 : f32 to vector<2x64xf32>
    %155 = arith.addf %154, %153 : vector<2x64xf32>
    %156 = arith.divf %154, %155 : vector<2x64xf32>
    %157 = arith.mulf %148, %135 : vector<2x64xf32>
    %158 = arith.mulf %147, %150 : vector<2x64xf32>
    %159 = arith.addf %157, %158 : vector<2x64xf32>
    %160 = math.tanh %159 : vector<2x64xf32>
    %161 = arith.mulf %156, %160 : vector<2x64xf32>
    %162 = vector.extract_strided_slice %12 {offsets = [12, 0], sizes = [2, 256], strides = [1, 1]} : vector<16x256xf32> to vector<2x256xf32>
    %cst_33 = arith.constant dense<0.000000e+00> : vector<2x256xf32>
    %163 = tpu.matmul %161, %13, %cst_33 {dimension_numbers = #tpu.dot_dimension_numbers<[1], [0], [0], [1], [0, 0, 1, 1], [], []>} : vector<2x64xf32>, vector<64x256xf32>, vector<2x256xf32> -> vector<2x256xf32>
    %164 = arith.addf %162, %163 : vector<2x256xf32>
    %165 = vector.extract_strided_slice %164 {offsets = [0, 0], sizes = [2, 128], strides = [1, 1]} : vector<2x256xf32> to vector<2x128xf32>
    %166 = arith.negf %165 : vector<2x128xf32>
    %167 = math.exp %166 : vector<2x128xf32>
    %cst_34 = arith.constant 1.000000e+00 : f32
    %168 = vector.broadcast %cst_34 : f32 to vector<2x128xf32>
    %169 = arith.addf %168, %167 : vector<2x128xf32>
    %170 = arith.divf %168, %169 : vector<2x128xf32>
    %171 = vector.extract_strided_slice %170 {offsets = [0, 0], sizes = [2, 64], strides = [1, 1]} : vector<2x128xf32> to vector<2x64xf32>
    %172 = vector.extract_strided_slice %170 {offsets = [0, 64], sizes = [2, 64], strides = [1, 1]} : vector<2x128xf32> to vector<2x64xf32>
    %173 = vector.extract_strided_slice %164 {offsets = [0, 128], sizes = [2, 64], strides = [1, 1]} : vector<2x256xf32> to vector<2x64xf32>
    %174 = math.tanh %173 : vector<2x64xf32>
    %175 = vector.extract_strided_slice %164 {offsets = [0, 192], sizes = [2, 64], strides = [1, 1]} : vector<2x256xf32> to vector<2x64xf32>
    %176 = arith.negf %175 : vector<2x64xf32>
    %177 = math.exp %176 : vector<2x64xf32>
    %cst_35 = arith.constant 1.000000e+00 : f32
    %178 = vector.broadcast %cst_35 : f32 to vector<2x64xf32>
    %179 = arith.addf %178, %177 : vector<2x64xf32>
    %180 = arith.divf %178, %179 : vector<2x64xf32>
    %181 = arith.mulf %172, %159 : vector<2x64xf32>
    %182 = arith.mulf %171, %174 : vector<2x64xf32>
    %183 = arith.addf %181, %182 : vector<2x64xf32>
    %184 = math.tanh %183 : vector<2x64xf32>
    %185 = arith.mulf %180, %184 : vector<2x64xf32>
    %186 = vector.extract_strided_slice %12 {offsets = [14, 0], sizes = [2, 256], strides = [1, 1]} : vector<16x256xf32> to vector<2x256xf32>
    %cst_36 = arith.constant dense<0.000000e+00> : vector<2x256xf32>
    %187 = tpu.matmul %185, %13, %cst_36 {dimension_numbers = #tpu.dot_dimension_numbers<[1], [0], [0], [1], [0, 0, 1, 1], [], []>} : vector<2x64xf32>, vector<64x256xf32>, vector<2x256xf32> -> vector<2x256xf32>
    %188 = arith.addf %186, %187 : vector<2x256xf32>
    %189 = vector.extract_strided_slice %188 {offsets = [0, 0], sizes = [2, 128], strides = [1, 1]} : vector<2x256xf32> to vector<2x128xf32>
    %190 = arith.negf %189 : vector<2x128xf32>
    %191 = math.exp %190 : vector<2x128xf32>
    %cst_37 = arith.constant 1.000000e+00 : f32
    %192 = vector.broadcast %cst_37 : f32 to vector<2x128xf32>
    %193 = arith.addf %192, %191 : vector<2x128xf32>
    %194 = arith.divf %192, %193 : vector<2x128xf32>
    %195 = vector.extract_strided_slice %194 {offsets = [0, 0], sizes = [2, 64], strides = [1, 1]} : vector<2x128xf32> to vector<2x64xf32>
    %196 = vector.extract_strided_slice %194 {offsets = [0, 64], sizes = [2, 64], strides = [1, 1]} : vector<2x128xf32> to vector<2x64xf32>
    %197 = vector.extract_strided_slice %188 {offsets = [0, 128], sizes = [2, 64], strides = [1, 1]} : vector<2x256xf32> to vector<2x64xf32>
    %198 = math.tanh %197 : vector<2x64xf32>
    %199 = vector.extract_strided_slice %188 {offsets = [0, 192], sizes = [2, 64], strides = [1, 1]} : vector<2x256xf32> to vector<2x64xf32>
    %200 = arith.negf %199 : vector<2x64xf32>
    %201 = math.exp %200 : vector<2x64xf32>
    %cst_38 = arith.constant 1.000000e+00 : f32
    %202 = vector.broadcast %cst_38 : f32 to vector<2x64xf32>
    %203 = arith.addf %202, %201 : vector<2x64xf32>
    %204 = arith.divf %202, %203 : vector<2x64xf32>
    %205 = arith.mulf %196, %183 : vector<2x64xf32>
    %206 = arith.mulf %195, %198 : vector<2x64xf32>
    %207 = arith.addf %205, %206 : vector<2x64xf32>
    %208 = math.tanh %207 : vector<2x64xf32>
    %209 = arith.mulf %204, %208 : vector<2x64xf32>
    %210 = tpu.concatenate %41, %65, %89, %113, %137, %161, %185, %209 in 0 : vector<2x64xf32>, vector<2x64xf32>, vector<2x64xf32>, vector<2x64xf32>, vector<2x64xf32>, vector<2x64xf32>, vector<2x64xf32>, vector<2x64xf32> -> vector<16x64xf32>
    %c152 = arith.constant 152 : index
    %c0_39 = arith.constant 0 : index
    %211 = vector.load %arg1[%c152, %c0_39] : memref<224x256xf32, #tpu.memory_space<vmem>>, vector<64x2xf32>
    %c216 = arith.constant 216 : index
    %c0_40 = arith.constant 0 : index
    %212 = vector.load %arg1[%c216, %c0_40] : memref<224x256xf32, #tpu.memory_space<vmem>>, vector<1x2xf32>
    %cst_41 = arith.constant dense<0.000000e+00> : vector<16x2xf32>
    %213 = tpu.matmul %210, %211, %cst_41 {dimension_numbers = #tpu.dot_dimension_numbers<[1], [0], [0], [1], [0, 0, 1, 1], [], []>} : vector<16x64xf32>, vector<64x2xf32>, vector<16x2xf32> -> vector<16x2xf32>
    %214 = vector.broadcast %212 : vector<1x2xf32> to vector<16x2xf32>
    %215 = arith.addf %213, %214 : vector<16x2xf32>
    %c0_42 = arith.constant 0 : index
    %c0_43 = arith.constant 0 : index
    %216 = vector.load %arg4[%c0_42, %c0_43] : memref<16x2xf32, #tpu.memory_space<vmem>>, vector<16x2xf32>
    tpu.vector_store %arg4[%c0_42, %c0_43], %215 {strides = array<i32>} : memref<16x2xf32, #tpu.memory_space<vmem>>, vector<16x2xf32>,
    %c0_44 = arith.constant 0 : index
    %c0_45 = arith.constant 0 : index
    %c0_46 = arith.constant 0 : index
    %217 = vector.load %arg5[%c0_44, %c0_45, %c0_46] : memref<1x2x64xf32, #tpu.memory_space<vmem>>, vector<1x2x64xf32>
    %218 = vector.shape_cast %217 : vector<1x2x64xf32> to vector<2x64xf32>
    %219 = vector.shape_cast %209 : vector<2x64xf32> to vector<1x2x64xf32>
    tpu.vector_store %arg5[%c0_44, %c0_45, %c0_46], %219 {strides = array<i32>} : memref<1x2x64xf32, #tpu.memory_space<vmem>>, vector<1x2x64xf32>,
    %c0_47 = arith.constant 0 : index
    %c0_48 = arith.constant 0 : index
    %c0_49 = arith.constant 0 : index
    %220 = vector.load %arg6[%c0_47, %c0_48, %c0_49] : memref<1x2x64xf32, #tpu.memory_space<vmem>>, vector<1x2x64xf32>
    %221 = vector.shape_cast %220 : vector<1x2x64xf32> to vector<2x64xf32>
    %222 = vector.shape_cast %207 : vector<2x64xf32> to vector<1x2x64xf32>
    tpu.vector_store %arg6[%c0_47, %c0_48, %c0_49], %222 {strides = array<i32>} : memref<1x2x64xf32, #tpu.memory_space<vmem>>, vector<1x2x64xf32>,
    return
  }
}

</mosaic_0001>

<llo_original>
// kernel: qnet_forward.1
$region0: #{qnet_forward.1}
  #allocation0 [shape = 'u32[]', space=smem, size = 0x4, offset = 0x4, fixed_abs, tag = 'smem constant byte address 0x4 - core index']
  #allocation1 [shape = 'u32[144,128]{1,0:T(1,128)}', space=vmem, size = 0x12000, scoped, tag = 'internal scratch']
  %s0 = inlined_call_operand.vmem [shape: f32[16,4], index: 0, kind: input, shape index: {}]
  %s1 = inlined_call_operand.hbm [shape: f32[224,256], index: 1, kind: input, shape index: {}]
  %s2 = inlined_call_operand.vmem [shape: f32[1,2,64], index: 2, kind: input, shape index: {}]
  %s3 = inlined_call_operand.vmem [shape: f32[1,2,64], index: 3, kind: input, shape index: {}]
  %s4 = inlined_call_operand.vmem [shape: f32[16,2], index: 4, kind: output, shape index: {0}]
  %s5 = inlined_call_operand.hbm [shape: f32[1,2,64], index: 5, kind: output, shape index: {1}]
  %s6 = inlined_call_operand.hbm [shape: f32[1,2,64], index: 6, kind: output, shape index: {2}]
  %7 = xla_tuple %s4, %s5, %s6
  %s8 = sld [smem:[#allocation0]]
  $region46: #{qnet_forward.1} parent=0
    _
  %s10 = ssub.s32 1, %s8
  %s11 = scalar_select 0, %s10, %s8
  $region1: #{qnet_forward.1} parent=0
    #allocation2 [shape = 'u8[229376]{0}', space=vmem, size = 0x38000, scoped, tag = 'input window, operand 1, single buffered']
    #allocation3 [shape = 's32[1]{0}', space=sflag, size = 0x4, scoped, tag = 'scoped memory for qnet_forward.1']
    #allocation4 [shape = 's32[1]{0}', space=sflag, size = 0x4, scoped, tag = 'scoped memory for qnet_forward.1']
    #allocation5 [shape = 'u8[1024]{0}', space=vmem, size = 0x400, scoped, tag = 'output window, operand 1, single buffered']
    #allocation6 [shape = 'u8[1024]{0}', space=vmem, size = 0x400, scoped, tag = 'output window, operand 2, single buffered']
    #allocation7 [shape = 's32[1]{0}', space=sflag, size = 0x4, scoped, tag = 'scoped memory for qnet_forward.1']
    %12 = vsyncpa [#allocation3], 0
    %13 = vsyncpa [#allocation4], 0
    %14 = vsyncpa [#allocation7], 0
    // Predicated region
    $region2: #{qnet_forward.1} parent=1 // pred_check
      _
    $region3: #{qnet_forward.1} parent=1 // pred_check_branch
      %16 = sbr.rel (0) target = $region5
    $region4: #{qnet_forward.1} parent=1 // pred_region
      _
    $region5: #{qnet_forward.1} parent=1 // pred_fallthru
      _
    // Predicated region
    $region6: #{qnet_forward.1} parent=1 // pred_check
      _
    $region7: #{qnet_forward.1} parent=1 // pred_check_branch
      %18 = sbr.rel (0) target = $region9
    $region8: #{qnet_forward.1} parent=1 // pred_region
      %s20 = ssub.s32 7168, 7168
      %21 = vsyncadd [#allocation3], %s20
      %s22 = sshll.u32 [#allocation2], 4
      %s23 = int_to_ptr.vmem [resolvable:$true] %s22
      %28 = dma.hbm_to_vmem [thread:$0]  %s1, 7168, %s23, [#allocation3], 256, 256, 16
    $region9: #{qnet_forward.1} parent=1 // pred_fallthru
      _
    // Predicated region
    $region10: #{qnet_forward.1} parent=1 // pred_check
      _
    $region11: #{qnet_forward.1} parent=1 // pred_check_branch
      %30 = sbr.rel (0) target = $region13
    $region12: #{qnet_forward.1} parent=1 // pred_region
      _
    $region13: #{qnet_forward.1} parent=1 // pred_fallthru
      _
    // Predicated region
    $region14: #{qnet_forward.1} parent=1 // pred_check
      _
    $region15: #{qnet_forward.1} parent=1 // pred_check_branch
      %32 = sbr.rel (0) target = $region17
    $region16: #{qnet_forward.1} parent=1 // pred_region
      _
    $region17: #{qnet_forward.1} parent=1 // pred_fallthru
      _
    // Predicated region
    $region18: #{qnet_forward.1} parent=1 // pred_check
      _
    $region19: #{qnet_forward.1} parent=1 // pred_check_branch
      %34 = sbr.rel (0) target = $region21
    $region20: #{qnet_forward.1} parent=1 // pred_region
      %35 = dma.done [#allocation3], 7168
    $region21: #{qnet_forward.1} parent=1 // pred_fallthru
      _
    %v36 = vld [vmem:[%s0] sm:$0xff]
    %v37 = vld [vmem:[%s0 + $0x8] sm:$0xff]
    %v38 = vld [vmem:[#allocation2] sm:$0xf]
    %v39 = vld [vmem:[#allocation2 + $0x10] ss:$0 sm:$0xff]
    %vm40 = vcmask 31744
    %v42 = vsel %vm40, %v36, 0
    %v45 = vsel %vm40, %v37, 0
    %vm47 = vcmask 1043456
    %v49 = vsel %vm47, %v38, 0
    %51 = vmatprep.subr.mxu0 0.0
    %52 = vmatpush1.msra.mxu0 %v49
    %53 = vmatprep.subr.mxu0 0.0
    %54 = vmatpush1.msra.mxu0 0.0
    %55 = vmatprep.subr.mxu0 0.0
    %56 = vmatpush1.msra.mxu0 0.0
    %57 = vmatprep.subr.mxu0 0.0
    %58 = vmatpush1.msra.mxu0 0.0
    %59 = vmatprep.subr.mxu0 0.0
    %60 = vmatpush1.msra.mxu0 0.0
    %61 = vmatprep.subr.mxu0 0.0
    %62 = vmatpush1.msra.mxu0 0.0
    %63 = vmatprep.subr.mxu0 0.0
    %64 = vmatpush1.msra.mxu0 0.0
    %65 = vmatprep.subr.mxu0 0.0
    %66 = vmatpush1.msra.mxu0 0.0
    %67 = vmatprep.subr.mxu0 0.0
    %68 = vmatpush1.msra.mxu0 0.0
    %69 = vmatprep.subr.mxu0 0.0
    %70 = vmatpush1.msra.mxu0 0.0
    %71 = vmatprep.subr.mxu0 0.0
    %72 = vmatpush1.msra.mxu0 0.0
    %73 = vmatprep.subr.mxu0 0.0
    %74 = vmatpush1.msra.mxu0 0.0
    %75 = vmatprep.subr.mxu0 0.0
    %76 = vmatpush1.msra.mxu0 0.0
    %77 = vmatprep.subr.mxu0 0.0
    %78 = vmatpush1.msra.mxu0 0.0
    %79 = vmatprep.subr.mxu0 0.0
    %80 = vmatpush1.msra.mxu0 0.0
    %81 = vmatprep.subr.mxu0 0.0
    %82 = vmatpush1.msra.mxu0 0.0
    %83 = vmatprep.subr.mxu0 0.0
    %84 = vmatpush1.msra.mxu0 0.0
    %85 = vmatprep.subr.mxu0 0.0
    %86 = vmatpush1.msra.mxu0 0.0
    %87 = vmatprep.subr.mxu0 0.0
    %88 = vmatpush1.msra.mxu0 0.0
    %89 = vmatprep.subr.mxu0 0.0
    %90 = vmatpush1.msra.mxu0 0.0
    %91 = vmatprep.subr.mxu0 0.0
    %92 = vmatpush1.msra.mxu0 0.0
    %93 = vmatprep.subr.mxu0 0.0
    %94 = vmatpush1.msra.mxu0 0.0
    %95 = vmatprep.subr.mxu0 0.0
    %96 = vmatpush1.msra.mxu0 0.0
    %97 = vmatprep.subr.mxu0 0.0
    %98 = vmatpush1.msra.mxu0 0.0
    %99 = vmatprep.subr.mxu0 0.0
    %100 = vmatpush1.msra.mxu0 0.0
    %101 = vmatprep.subr.mxu0 0.0
    %102 = vmatpush1.msra.mxu0 0.0
    %103 = vmatprep.subr.mxu0 0.0
    %104 = vmatpush1.msra.mxu0 0.0
    %105 = vmatprep.subr.mxu0 0.0
    %106 = vmatpush1.msra.mxu0 0.0
    %107 = vmatprep.subr.mxu0 0.0
    %108 = vmatpush1.msra.mxu0 0.0
    %109 = vmatprep.subr.mxu0 0.0
    %110 = vmatpush1.msra.mxu0 0.0
    %111 = vmatprep.subr.mxu0 0.0
    %112 = vmatpush1.msra.mxu0 0.0
    %113 = vmatprep.subr.mxu0 0.0
    %114 = vmatpush1.msra.mxu0 0.0
    %115 = vmatprep.mubr.f32.mxu0 0.0
    %116 = vmatmul.mubr.f32.gmra.mrb[0].mxu0 %v42
    %v117 = vpop.f32.mrb[0].mxu0
    %v118 = vadd.f32 %v39, %v117
    %v119 = vpop.f32.mrb[0].mxu0
    %120 = vmatprep.mubr.f32.mxu0 0.0
    %121 = vmatmul.mubr.f32.gmra.mrb[0].mxu0 %v45
    %v122 = vpop.f32.mrb[0].mxu0
    %v123 = vadd.f32 %v39, %v122
    %v124 = vpop.f32.mrb[0].mxu0
    %125 = vdwg.mxu0
    %v126 = vmax.f32 %v118, 0.0
    %v127 = vmax.f32 %v123, 0.0
    %v128 = vld [vmem:[#allocation2 + $0x20] sm:$0xff]
    %v129 = vld [vmem:[#allocation2 + $0x28] sm:$0xff]
    %v130 = vld [vmem:[#allocation2 + $0x30] sm:$0xff]
    %v131 = vld [vmem:[#allocation2 + $0x38] sm:$0xff]
    %v132 = vld [vmem:[#allocation2 + $0x40] sm:$0xff]
    %v133 = vld [vmem:[#allocation2 + $0x48] sm:$0xff]
    %v134 = vld [vmem:[#allocation2 + $0x50] sm:$0xff]
    %v135 = vld [vmem:[#allocation2 + $0x58] sm:$0xff]
    %v136 = vld [vmem:[#allocation2 + $0x60] sm:$0xff]
    %v137 = vld [vmem:[#allocation2 + $0x68] sm:$0xff]
    %v138 = vld [vmem:[#allocation2 + $0x70] sm:$0xff]
    %v139 = vld [vmem:[#allocation2 + $0x78] sm:$0xff]
    %v140 = vld [vmem:[#allocation2 + $0x80] sm:$0xff]
    %v141 = vld [vmem:[#allocation2 + $0x88] sm:$0xff]
    %v142 = vld [vmem:[#allocation2 + $0x90] sm:$0xff]
    %v143 = vld [vmem:[#allocation2 + $0x98] sm:$0xff]
    %s144 = scalar_lea.vmem [#allocation2], 288
    %v145 = vld [vmem:[%s144] ss:$8 sm:$0x3]
    %v147 = vlaneseq
    %v148 = vshrl.u32 %v147, 7
    %v149 = vsub.s32 0, %v148
    %v150 = vrot.slane %v145, %v149
    %v151 = vlaneseq
    %v152 = vshrl.u32 %v151, 7
    %v153 = vsub.s32 1, %v152
    %v154 = vrot.slane %v145, %v153
    %vm157 = vcmask 523264
    %v159 = vsel %vm157, %v126, 0
    %v162 = vsel %vm157, %v127, 0
    %164 = vmatprep.subr.mxu0 %v129
    %165 = vmatpush1.msra.mxu0 %v128
    %166 = vmatprep.subr.mxu0 %v131
    %167 = vmatpush1.msra.mxu0 %v130
    %168 = vmatprep.subr.mxu0 %v133
    %169 = vmatpush1.msra.mxu0 %v132
    %170 = vmatprep.subr.mxu0 %v135
    %171 = vmatpush1.msra.mxu0 %v134
    %172 = vmatprep.subr.mxu0 %v137
    %173 = vmatpush1.msra.mxu0 %v136
    %174 = vmatprep.subr.mxu0 %v139
    %175 = vmatpush1.msra.mxu0 %v138
    %176 = vmatprep.subr.mxu0 %v141
    %177 = vmatpush1.msra.mxu0 %v140
    %178 = vmatprep.subr.mxu0 %v143
    %179 = vmatpush1.msra.mxu0 %v142
    %180 = vmatprep.subr.mxu0 0.0
    %181 = vmatpush1.msra.mxu0 0.0
    %182 = vmatprep.subr.mxu0 0.0
    %183 = vmatpush1.msra.mxu0 0.0
    %184 = vmatprep.subr.mxu0 0.0
    %185 = vmatpush1.msra.mxu0 0.0
    %186 = vmatprep.subr.mxu0 0.0
    %187 = vmatpush1.msra.mxu0 0.0
    %188 = vmatprep.subr.mxu0 0.0
    %189 = vmatpush1.msra.mxu0 0.0
    %190 = vmatprep.subr.mxu0 0.0
    %191 = vmatpush1.msra.mxu0 0.0
    %192 = vmatprep.subr.mxu0 0.0
    %193 = vmatpush1.msra.mxu0 0.0
    %194 = vmatprep.subr.mxu0 0.0
    %195 = vmatpush1.msra.mxu0 0.0
    %196 = vmatprep.subr.mxu0 0.0
    %197 = vmatpush1.msra.mxu0 0.0
    %198 = vmatprep.subr.mxu0 0.0
    %199 = vmatpush1.msra.mxu0 0.0
    %200 = vmatprep.subr.mxu0 0.0
    %201 = vmatpush1.msra.mxu0 0.0
    %202 = vmatprep.subr.mxu0 0.0
    %203 = vmatpush1.msra.mxu0 0.0
    %204 = vmatprep.subr.mxu0 0.0
    %205 = vmatpush1.msra.mxu0 0.0
    %206 = vmatprep.subr.mxu0 0.0
    %207 = vmatpush1.msra.mxu0 0.0
    %208 = vmatprep.subr.mxu0 0.0
    %209 = vmatpush1.msra.mxu0 0.0
    %210 = vmatprep.subr.mxu0 0.0
    %211 = vmatpush1.msra.mxu0 0.0
    %212 = vmatprep.subr.mxu0 0.0
    %213 = vmatpush1.msra.mxu0 0.0
    %214 = vmatprep.subr.mxu0 0.0
    %215 = vmatpush1.msra.mxu0 0.0
    %216 = vmatprep.subr.mxu0 0.0
    %217 = vmatpush1.msra.mxu0 0.0
    %218 = vmatprep.subr.mxu0 0.0
    %219 = vmatpush1.msra.mxu0 0.0
    %220 = vmatprep.subr.mxu0 0.0
    %221 = vmatpush1.msra.mxu0 0.0
    %222 = vmatprep.subr.mxu0 0.0
    %223 = vmatpush1.msra.mxu0 0.0
    %224 = vmatprep.subr.mxu0 0.0
    %225 = vmatpush1.msra.mxu0 0.0
    %226 = vmatprep.subr.mxu0 0.0
    %227 = vmatpush1.msra.mxu0 0.0
    %228 = vmatprep.mubr.f32.mxu0 0.0
    %229 = vmatmul.mubr.f32.gmra.mrb[0].mxu0 %v159
    %v230 = vpop.f32.mrb[0].mxu0
    %v231 = vadd.f32 %v150, %v230
    %v232 = vpop.f32.mrb[0].mxu0
    %v233 = vadd.f32 %v154, %v232
    %234 = vmatprep.mubr.f32.mxu0 0.0
    %235 = vmatmul.mubr.f32.gmra.mrb[0].mxu0 %v162
    %v236 = vpop.f32.mrb[0].mxu0
    %v237 = vadd.f32 %v150, %v236
    %v238 = vpop.f32.mrb[0].mxu0
    %v239 = vadd.f32 %v154, %v238
    %240 = vdwg.mxu0
    %v241 = vld [vmem:[#allocation2 + $0xa0] sm:$0xff]
    %v242 = vld [vmem:[#allocation2 + $0xa8] sm:$0xff]
    %v243 = vld [vmem:[#allocation2 + $0xb0] sm:$0xff]
    %v244 = vld [vmem:[#allocation2 + $0xb8] sm:$0xff]
    %v245 = vld [vmem:[#allocation2 + $0xc0] sm:$0xff]
    %v246 = vld [vmem:[#allocation2 + $0xc8] sm:$0xff]
    %v247 = vld [vmem:[#allocation2 + $0xd0] sm:$0xff]
    %v248 = vld [vmem:[#allocation2 + $0xd8] sm:$0xff]
    %v249 = vld [vmem:[#allocation2 + $0xe0] sm:$0xff]
    %v250 = vld [vmem:[#allocation2 + $0xe8] sm:$0xff]
    %v251 = vld [vmem:[#allocation2 + $0xf0] sm:$0xff]
    %v252 = vld [vmem:[#allocation2 + $0xf8] sm:$0xff]
    %v253 = vld [vmem:[#allocation2 + $0x100] sm:$0xff]
    %v254 = vld [vmem:[#allocation2 + $0x108] sm:$0xff]
    %v255 = vld [vmem:[#allocation2 + $0x110] sm:$0xff]
    %v256 = vld [vmem:[#allocation2 + $0x118] sm:$0xff]
    %v257 = vld [vmem:[%s2] sm:$0x3]
    %v258 = vld [vmem:[%s3] sm:$0x3]
    %v260 = vsel %vm157, %v257, 0
    %262 = vmatprep.subr.mxu0 %v242
    %263 = vmatpush1.msra.mxu0 %v241
    %264 = vmatprep.subr.mxu0 %v244
    %265 = vmatpush1.msra.mxu0 %v243
    %266 = vmatprep.subr.mxu0 %v246
    %267 = vmatpush1.msra.mxu0 %v245
    %268 = vmatprep.subr.mxu0 %v248
    %269 = vmatpush1.msra.mxu0 %v247
    %270 = vmatprep.subr.mxu0 %v250
    %271 = vmatpush1.msra.mxu0 %v249
    %272 = vmatprep.subr.mxu0 %v252
    %273 = vmatpush1.msra.mxu0 %v251
    %274 = vmatprep.subr.mxu0 %v254
    %275 = vmatpush1.msra.mxu0 %v253
    %276 = vmatprep.subr.mxu0 %v256
    %277 = vmatpush1.msra.mxu0 %v255
    %278 = vmatprep.subr.mxu0 0.0
    %279 = vmatpush1.msra.mxu0 0.0
    %280 = vmatprep.subr.mxu0 0.0
    %281 = vmatpush1.msra.mxu0 0.0
    %282 = vmatprep.subr.mxu0 0.0
    %283 = vmatpush1.msra.mxu0 0.0
    %284 = vmatprep.subr.mxu0 0.0
    %285 = vmatpush1.msra.mxu0 0.0
    %286 = vmatprep.subr.mxu0 0.0
    %287 = vmatpush1.msra.mxu0 0.0
    %288 = vmatprep.subr.mxu0 0.0
    %289 = vmatpush1.msra.mxu0 0.0
    %290 = vmatprep.subr.mxu0 0.0
    %291 = vmatpush1.msra.mxu0 0.0
    %292 = vmatprep.subr.mxu0 0.0
    %293 = vmatpush1.msra.mxu0 0.0
    %294 = vmatprep.subr.mxu0 0.0
    %295 = vmatpush1.msra.mxu0 0.0
    %296 = vmatprep.subr.mxu0 0.0
    %297 = vmatpush1.msra.mxu0 0.0
    %298 = vmatprep.subr.mxu0 0.0
    %299 = vmatpush1.msra.mxu0 0.0
    %300 = vmatprep.subr.mxu0 0.0
    %301 = vmatpush1.msra.mxu0 0.0
    %302 = vmatprep.subr.mxu0 0.0
    %303 = vmatpush1.msra.mxu0 0.0
    %304 = vmatprep.subr.mxu0 0.0
    %305 = vmatpush1.msra.mxu0 0.0
    %306 = vmatprep.subr.mxu0 0.0
    %307 = vmatpush1.msra.mxu0 0.0
    %308 = vmatprep.subr.mxu0 0.0
    %309 = vmatpush1.msra.mxu0 0.0
    %310 = vmatprep.subr.mxu0 0.0
    %311 = vmatpush1.msra.mxu0 0.0
    %312 = vmatprep.subr.mxu0 0.0
    %313 = vmatpush1.msra.mxu0 0.0
    %314 = vmatprep.subr.mxu0 0.0
    %315 = vmatpush1.msra.mxu0 0.0
    %316 = vmatprep.subr.mxu0 0.0
    %317 = vmatpush1.msra.mxu0 0.0
    %318 = vmatprep.subr.mxu0 0.0
    %319 = vmatpush1.msra.mxu0 0.0
    %320 = vmatprep.subr.mxu0 0.0
    %321 = vmatpush1.msra.mxu0 0.0
    %322 = vmatprep.subr.mxu0 0.0
    %323 = vmatpush1.msra.mxu0 0.0
    %324 = vmatprep.subr.mxu0 0.0
    %325 = vmatpush1.msra.mxu0 0.0
    %326 = vmatprep.mubr.f32.mxu0 0.0
    %327 = vmatmul.mubr.f32.gmra.mrb[0].mxu0 %v260
    %v328 = vpop.f32.mrb[0].mxu0
    %v329 = vadd.f32 0.0, %v328
    %v330 = vpop.f32.mrb[0].mxu0
    %v331 = vadd.f32 0.0, %v330
    %332 = vdwg.mxu0
    %v333 = vadd.f32 %v231, %v329
    %v334 = vadd.f32 %v233, %v331
    %v335 = vxor.u32 %v333, 2147483648
    %v336 = vmul.f32 %v335, 1.442695
    %v337 = vpow.pop %v336
    %v338 = vadd.f32 %v337, 1.0
    %v339 = vrcp.pop %v338
    %v340 = vmul.f32 1.0, %v339
    %v341 = vtanh.pop %v334
    %v342 = vxor.u32 %v334, 2147483648
    %v343 = vmul.f32 %v342, 1.442695
    %v344 = vpow.pop %v343
    %v345 = vadd.f32 %v344, 1.0
    %v346 = vrcp.pop %v345
    %v347 = vmul.f32 1.0, %v346
    %349 = vrot.lane.b32.xlu0 %v258, 64
    %v350 = vpop.permute.xlu0 %349
    %v352 = vmul.f32 %v340, %v350
    %v353 = vmul.f32 %v340, %v341
    %355 = vrot.lane.b32.xlu0 %v353, 64
    %v356 = vpop.permute.xlu0 %355
    %v358 = vadd.f32 %v352, %v356
    %v359 = vtanh.pop %v358
    %v360 = vmul.f32 %v347, %v359
    %362 = vrot.lane.b32.xlu0 %v360, 64
    %v363 = vpop.permute.xlu0 %362
    %v364 = vsel %vm157, %v363, 0
    %366 = vmatprep.subr.mxu0 %v242
    %367 = vmatpush1.msra.mxu0 %v241
    %368 = vmatprep.subr.mxu0 %v244
    %369 = vmatpush1.msra.mxu0 %v243
    %370 = vmatprep.subr.mxu0 %v246
    %371 = vmatpush1.msra.mxu0 %v245
    %372 = vmatprep.subr.mxu0 %v248
    %373 = vmatpush1.msra.mxu0 %v247
    %374 = vmatprep.subr.mxu0 %v250
    %375 = vmatpush1.msra.mxu0 %v249
    %376 = vmatprep.subr.mxu0 %v252
    %377 = vmatpush1.msra.mxu0 %v251
    %378 = vmatprep.subr.mxu0 %v254
    %379 = vmatpush1.msra.mxu0 %v253
    %380 = vmatprep.subr.mxu0 %v256
    %381 = vmatpush1.msra.mxu0 %v255
    %382 = vmatprep.subr.mxu0 0.0
    %383 = vmatpush1.msra.mxu0 0.0
    %384 = vmatprep.subr.mxu0 0.0
    %385 = vmatpush1.msra.mxu0 0.0
    %386 = vmatprep.subr.mxu0 0.0
    %387 = vmatpush1.msra.mxu0 0.0
    %388 = vmatprep.subr.mxu0 0.0
    %389 = vmatpush1.msra.mxu0 0.0
    %390 = vmatprep.subr.mxu0 0.0
    %391 = vmatpush1.msra.mxu0 0.0
    %392 = vmatprep.subr.mxu0 0.0
    %393 = vmatpush1.msra.mxu0 0.0
    %394 = vmatprep.subr.mxu0 0.0
    %395 = vmatpush1.msra.mxu0 0.0
    %396 = vmatprep.subr.mxu0 0.0
    %397 = vmatpush1.msra.mxu0 0.0
    %398 = vmatprep.subr.mxu0 0.0
    %399 = vmatpush1.msra.mxu0 0.0
    %400 = vmatprep.subr.mxu0 0.0
    %401 = vmatpush1.msra.mxu0 0.0
    %402 = vmatprep.subr.mxu0 0.0
    %403 = vmatpush1.msra.mxu0 0.0
    %404 = vmatprep.subr.mxu0 0.0
    %405 = vmatpush1.msra.mxu0 0.0
    %406 = vmatprep.subr.mxu0 0.0
    %407 = vmatpush1.msra.mxu0 0.0
    %408 = vmatprep.subr.mxu0 0.0
    %409 = vmatpush1.msra.mxu0 0.0
    %410 = vmatprep.subr.mxu0 0.0
    %411 = vmatpush1.msra.mxu0 0.0
    %412 = vmatprep.subr.mxu0 0.0
    %413 = vmatpush1.msra.mxu0 0.0
    %414 = vmatprep.subr.mxu0 0.0
    %415 = vmatpush1.msra.mxu0 0.0
    %416 = vmatprep.subr.mxu0 0.0
    %417 = vmatpush1.msra.mxu0 0.0
    %418 = vmatprep.subr.mxu0 0.0
    %419 = vmatpush1.msra.mxu0 0.0
    %420 = vmatprep.subr.mxu0 0.0
    %421 = vmatpush1.msra.mxu0 0.0
    %422 = vmatprep.subr.mxu0 0.0
    %423 = vmatpush1.msra.mxu0 0.0
    %424 = vmatprep.subr.mxu0 0.0
    %425 = vmatpush1.msra.mxu0 0.0
    %426 = vmatprep.subr.mxu0 0.0
    %427 = vmatpush1.msra.mxu0 0.0
    %428 = vmatprep.subr.mxu0 0.0
    %429 = vmatpush1.msra.mxu0 0.0
    %430 = vmatprep.mubr.f32.mxu0 0.0
    %431 = vmatmul.mubr.f32.gmra.mrb[0].mxu0 %v364
    %v432 = vpop.f32.mrb[0].mxu0
    %v433 = vadd.f32 0.0, %v432
    %v434 = vpop.f32.mrb[0].mxu0
    %v435 = vadd.f32 0.0, %v434
    %436 = vdwg.mxu0
    %v439 = vrot.slane %v433, 6
    %v440 = vrot.slane %v435, 6
    %v443 = vadd.f32 %v231, %v439
    %v444 = vadd.f32 %v233, %v440
    %v445 = vxor.u32 %v443, 2147483648
    %v446 = vmul.f32 %v445, 1.442695
    %v447 = vpow.pop %v446
    %v448 = vadd.f32 %v447, 1.0
    %v449 = vrcp.pop %v448
    %v450 = vmul.f32 1.0, %v449
    %v451 = vtanh.pop %v444
    %v452 = vxor.u32 %v444, 2147483648
    %v453 = vmul.f32 %v452, 1.442695
    %v454 = vpow.pop %v453
    %v455 = vadd.f32 %v454, 1.0
    %v456 = vrcp.pop %v455
    %v457 = vmul.f32 1.0, %v456
    %v459 = vrot.slane %v358, 6
    %v461 = vmul.f32 %v450, %v459
    %v462 = vmul.f32 %v450, %v451
    %464 = vrot.lane.b32.xlu0 %v462, 64
    %v465 = vpop.permute.xlu0 %464
    %v467 = vadd.f32 %v461, %v465
    %v468 = vtanh.pop %v467
    %v469 = vmul.f32 %v457, %v468
    %v471 = vrot.slane %v469, 2
    %472 = vrot.lane.b32.xlu0 %v471, 64
    %v473 = vpop.permute.xlu0 %472
    %v474 = vsel %vm157, %v473, 0
    %476 = vmatprep.subr.mxu0 %v242
    %477 = vmatpush1.msra.mxu0 %v241
    %478 = vmatprep.subr.mxu0 %v244
    %479 = vmatpush1.msra.mxu0 %v243
    %480 = vmatprep.subr.mxu0 %v246
    %481 = vmatpush1.msra.mxu0 %v245
    %482 = vmatprep.subr.mxu0 %v248
    %483 = vmatpush1.msra.mxu0 %v247
    %484 = vmatprep.subr.mxu0 %v250
    %485 = vmatpush1.msra.mxu0 %v249
    %486 = vmatprep.subr.mxu0 %v252
    %487 = vmatpush1.msra.mxu0 %v251
    %488 = vmatprep.subr.mxu0 %v254
    %489 = vmatpush1.msra.mxu0 %v253
    %490 = vmatprep.subr.mxu0 %v256
    %491 = vmatpush1.msra.mxu0 %v255
    %492 = vmatprep.subr.mxu0 0.0
    %493 = vmatpush1.msra.mxu0 0.0
    %494 = vmatprep.subr.mxu0 0.0
    %495 = vmatpush1.msra.mxu0 0.0
    %496 = vmatprep.subr.mxu0 0.0
    %497 = vmatpush1.msra.mxu0 0.0
    %498 = vmatprep.subr.mxu0 0.0
    %499 = vmatpush1.msra.mxu0 0.0
    %500 = vmatprep.subr.mxu0 0.0
    %501 = vmatpush1.msra.mxu0 0.0
    %502 = vmatprep.subr.mxu0 0.0
    %503 = vmatpush1.msra.mxu0 0.0
    %504 = vmatprep.subr.mxu0 0.0
    %505 = vmatpush1.msra.mxu0 0.0
    %506 = vmatprep.subr.mxu0 0.0
    %507 = vmatpush1.msra.mxu0 0.0
    %508 = vmatprep.subr.mxu0 0.0
    %509 = vmatpush1.msra.mxu0 0.0
    %510 = vmatprep.subr.mxu0 0.0
    %511 = vmatpush1.msra.mxu0 0.0
    %512 = vmatprep.subr.mxu0 0.0
    %513 = vmatpush1.msra.mxu0 0.0
    %514 = vmatprep.subr.mxu0 0.0
    %515 = vmatpush1.msra.mxu0 0.0
    %516 = vmatprep.subr.mxu0 0.0
    %517 = vmatpush1.msra.mxu0 0.0
    %518 = vmatprep.subr.mxu0 0.0
    %519 = vmatpush1.msra.mxu0 0.0
    %520 = vmatprep.subr.mxu0 0.0
    %521 = vmatpush1.msra.mxu0 0.0
    %522 = vmatprep.subr.mxu0 0.0
    %523 = vmatpush1.msra.mxu0 0.0
    %524 = vmatprep.subr.mxu0 0.0
    %525 = vmatpush1.msra.mxu0 0.0
    %526 = vmatprep.subr.mxu0 0.0
    %527 = vmatpush1.msra.mxu0 0.0
    %528 = vmatprep.subr.mxu0 0.0
    %529 = vmatpush1.msra.mxu0 0.0
    %530 = vmatprep.subr.mxu0 0.0
    %531 = vmatpush1.msra.mxu0 0.0
    %532 = vmatprep.subr.mxu0 0.0
    %533 = vmatpush1.msra.mxu0 0.0
    %534 = vmatprep.subr.mxu0 0.0
    %535 = vmatpush1.msra.mxu0 0.0
    %536 = vmatprep.subr.mxu0 0.0
    %537 = vmatpush1.msra.mxu0 0.0
    %538 = vmatprep.subr.mxu0 0.0
    %539 = vmatpush1.msra.mxu0 0.0
    %540 = vmatprep.mubr.f32.mxu0 0.0
    %541 = vmatmul.mubr.f32.gmra.mrb[0].mxu0 %v474
    %v542 = vpop.f32.mrb[0].mxu0
    %v543 = vadd.f32 0.0, %v542
    %v544 = vpop.f32.mrb[0].mxu0
    %v545 = vadd.f32 0.0, %v544
    %546 = vdwg.mxu0
    %v549 = vrot.slane %v543, 4
    %v550 = vrot.slane %v545, 4
    %v553 = vadd.f32 %v231, %v549
    %v554 = vadd.f32 %v233, %v550
    %v555 = vxor.u32 %v553, 2147483648
    %v556 = vmul.f32 %v555, 1.442695
    %v557 = vpow.pop %v556
    %v558 = vadd.f32 %v557, 1.0
    %v559 = vrcp.pop %v558
    %v560 = vmul.f32 1.0, %v559
    %v561 = vtanh.pop %v554
    %v562 = vxor.u32 %v554, 2147483648
    %v563 = vmul.f32 %v562, 1.442695
    %v564 = vpow.pop %v563
    %v565 = vadd.f32 %v564, 1.0
    %v566 = vrcp.pop %v565
    %v567 = vmul.f32 1.0, %v566
    %v569 = vrot.slane %v467, 6
    %v571 = vmul.f32 %v560, %v569
    %v572 = vmul.f32 %v560, %v561
    %574 = vrot.lane.b32.xlu0 %v572, 64
    %v575 = vpop.permute.xlu0 %574
    %v577 = vadd.f32 %v571, %v575
    %v578 = vtanh.pop %v577
    %v579 = vmul.f32 %v567, %v578
    %v581 = vrot.slane %v579, 4
    %582 = vrot.lane.b32.xlu0 %v581, 64
    %v583 = vpop.permute.xlu0 %582
    %v584 = vsel %vm157, %v583, 0
    %586 = vmatprep.subr.mxu0 %v242
    %587 = vmatpush1.msra.mxu0 %v241
    %588 = vmatprep.subr.mxu0 %v244
    %589 = vmatpush1.msra.mxu0 %v243
    %590 = vmatprep.subr.mxu0 %v246
    %591 = vmatpush1.msra.mxu0 %v245
    %592 = vmatprep.subr.mxu0 %v248
    %593 = vmatpush1.msra.mxu0 %v247
    %594 = vmatprep.subr.mxu0 %v250
    %595 = vmatpush1.msra.mxu0 %v249
    %596 = vmatprep.subr.mxu0 %v252
    %597 = vmatpush1.msra.mxu0 %v251
    %598 = vmatprep.subr.mxu0 %v254
    %599 = vmatpush1.msra.mxu0 %v253
    %600 = vmatprep.subr.mxu0 %v256
    %601 = vmatpush1.msra.mxu0 %v255
    %602 = vmatprep.subr.mxu0 0.0
    %603 = vmatpush1.msra.mxu0 0.0
    %604 = vmatprep.subr.mxu0 0.0
    %605 = vmatpush1.msra.mxu0 0.0
    %606 = vmatprep.subr.mxu0 0.0
    %607 = vmatpush1.msra.mxu0 0.0
    %608 = vmatprep.subr.mxu0 0.0
    %609 = vmatpush1.msra.mxu0 0.0
    %610 = vmatprep.subr.mxu0 0.0
    %611 = vmatpush1.msra.mxu0 0.0
    %612 = vmatprep.subr.mxu0 0.0
    %613 = vmatpush1.msra.mxu0 0.0
    %614 = vmatprep.subr.mxu0 0.0
    %615 = vmatpush1.msra.mxu0 0.0
    %616 = vmatprep.subr.mxu0 0.0
    %617 = vmatpush1.msra.mxu0 0.0
    %618 = vmatprep.subr.mxu0 0.0
    %619 = vmatpush1.msra.mxu0 0.0
    %620 = vmatprep.subr.mxu0 0.0
    %621 = vmatpush1.msra.mxu0 0.0
    %622 = vmatprep.subr.mxu0 0.0
    %623 = vmatpush1.msra.mxu0 0.0
    %624 = vmatprep.subr.mxu0 0.0
    %625 = vmatpush1.msra.mxu0 0.0
    %626 = vmatprep.subr.mxu0 0.0
    %627 = vmatpush1.msra.mxu0 0.0
    %628 = vmatprep.subr.mxu0 0.0
    %629 = vmatpush1.msra.mxu0 0.0
    %630 = vmatprep.subr.mxu0 0.0
    %631 = vmatpush1.msra.mxu0 0.0
    %632 = vmatprep.subr.mxu0 0.0
    %633 = vmatpush1.msra.mxu0 0.0
    %634 = vmatprep.subr.mxu0 0.0
    %635 = vmatpush1.msra.mxu0 0.0
    %636 = vmatprep.subr.mxu0 0.0
    %637 = vmatpush1.msra.mxu0 0.0
    %638 = vmatprep.subr.mxu0 0.0
    %639 = vmatpush1.msra.mxu0 0.0
    %640 = vmatprep.subr.mxu0 0.0
    %641 = vmatpush1.msra.mxu0 0.0
    %642 = vmatprep.subr.mxu0 0.0
    %643 = vmatpush1.msra.mxu0 0.0
    %644 = vmatprep.subr.mxu0 0.0
    %645 = vmatpush1.msra.mxu0 0.0
    %646 = vmatprep.subr.mxu0 0.0
    %647 = vmatpush1.msra.mxu0 0.0
    %648 = vmatprep.subr.mxu0 0.0
    %649 = vmatpush1.msra.mxu0 0.0
    %650 = vmatprep.mubr.f32.mxu0 0.0
    %651 = vmatmul.mubr.f32.gmra.mrb[0].mxu0 %v584
    %v652 = vpop.f32.mrb[0].mxu0
    %v653 = vadd.f32 0.0, %v652
    %v654 = vpop.f32.mrb[0].mxu0
    %v655 = vadd.f32 0.0, %v654
    %656 = vdwg.mxu0
    %v659 = vrot.slane %v653, 2
    %v660 = vrot.slane %v655, 2
    %v663 = vadd.f32 %v231, %v659
    %v664 = vadd.f32 %v233, %v660
    %v665 = vxor.u32 %v663, 2147483648
    %v666 = vmul.f32 %v665, 1.442695
    %v667 = vpow.pop %v666
    %v668 = vadd.f32 %v667, 1.0
    %v669 = vrcp.pop %v668
    %v670 = vmul.f32 1.0, %v669
    %v671 = vtanh.pop %v664
    %v672 = vxor.u32 %v664, 2147483648
    %v673 = vmul.f32 %v672, 1.442695
    %v674 = vpow.pop %v673
    %v675 = vadd.f32 %v674, 1.0
    %v676 = vrcp.pop %v675
    %v677 = vmul.f32 1.0, %v676
    %v679 = vrot.slane %v577, 6
    %v681 = vmul.f32 %v670, %v679
    %v682 = vmul.f32 %v670, %v671
    %684 = vrot.lane.b32.xlu0 %v682, 64
    %v685 = vpop.permute.xlu0 %684
    %v687 = vadd.f32 %v681, %v685
    %v688 = vtanh.pop %v687
    %v689 = vmul.f32 %v677, %v688
    %v691 = vrot.slane %v689, 6
    %692 = vrot.lane.b32.xlu0 %v691, 64
    %v693 = vpop.permute.xlu0 %692
    %v694 = vsel %vm157, %v693, 0
    %696 = vmatprep.subr.mxu0 %v242
    %697 = vmatpush1.msra.mxu0 %v241
    %698 = vmatprep.subr.mxu0 %v244
    %699 = vmatpush1.msra.mxu0 %v243
    %700 = vmatprep.subr.mxu0 %v246
    %701 = vmatpush1.msra.mxu0 %v245
    %702 = vmatprep.subr.mxu0 %v248
    %703 = vmatpush1.msra.mxu0 %v247
    %704 = vmatprep.subr.mxu0 %v250
    %705 = vmatpush1.msra.mxu0 %v249
    %706 = vmatprep.subr.mxu0 %v252
    %707 = vmatpush1.msra.mxu0 %v251
    %708 = vmatprep.subr.mxu0 %v254
    %709 = vmatpush1.msra.mxu0 %v253
    %710 = vmatprep.subr.mxu0 %v256
    %711 = vmatpush1.msra.mxu0 %v255
    %712 = vmatprep.subr.mxu0 0.0
    %713 = vmatpush1.msra.mxu0 0.0
    %714 = vmatprep.subr.mxu0 0.0
    %715 = vmatpush1.msra.mxu0 0.0
    %716 = vmatprep.subr.mxu0 0.0
    %717 = vmatpush1.msra.mxu0 0.0
    %718 = vmatprep.subr.mxu0 0.0
    %719 = vmatpush1.msra.mxu0 0.0
    %720 = vmatprep.subr.mxu0 0.0
    %721 = vmatpush1.msra.mxu0 0.0
    %722 = vmatprep.subr.mxu0 0.0
    %723 = vmatpush1.msra.mxu0 0.0
    %724 = vmatprep.subr.mxu0 0.0
    %725 = vmatpush1.msra.mxu0 0.0
    %726 = vmatprep.subr.mxu0 0.0
    %727 = vmatpush1.msra.mxu0 0.0
    %728 = vmatprep.subr.mxu0 0.0
    %729 = vmatpush1.msra.mxu0 0.0
    %730 = vmatprep.subr.mxu0 0.0
    %731 = vmatpush1.msra.mxu0 0.0
    %732 = vmatprep.subr.mxu0 0.0
    %733 = vmatpush1.msra.mxu0 0.0
    %734 = vmatprep.subr.mxu0 0.0
    %735 = vmatpush1.msra.mxu0 0.0
    %736 = vmatprep.subr.mxu0 0.0
    %737 = vmatpush1.msra.mxu0 0.0
    %738 = vmatprep.subr.mxu0 0.0
    %739 = vmatpush1.msra.mxu0 0.0
    %740 = vmatprep.subr.mxu0 0.0
    %741 = vmatpush1.msra.mxu0 0.0
    %742 = vmatprep.subr.mxu0 0.0
    %743 = vmatpush1.msra.mxu0 0.0
    %744 = vmatprep.subr.mxu0 0.0
    %745 = vmatpush1.msra.mxu0 0.0
    %746 = vmatprep.subr.mxu0 0.0
    %747 = vmatpush1.msra.mxu0 0.0
    %748 = vmatprep.subr.mxu0 0.0
    %749 = vmatpush1.msra.mxu0 0.0
    %750 = vmatprep.subr.mxu0 0.0
    %751 = vmatpush1.msra.mxu0 0.0
    %752 = vmatprep.subr.mxu0 0.0
    %753 = vmatpush1.msra.mxu0 0.0
    %754 = vmatprep.subr.mxu0 0.0
    %755 = vmatpush1.msra.mxu0 0.0
    %756 = vmatprep.subr.mxu0 0.0
    %757 = vmatpush1.msra.mxu0 0.0
    %758 = vmatprep.subr.mxu0 0.0
    %759 = vmatpush1.msra.mxu0 0.0
    %760 = vmatprep.mubr.f32.mxu0 0.0
    %761 = vmatmul.mubr.f32.gmra.mrb[0].mxu0 %v694
    %v762 = vpop.f32.mrb[0].mxu0
    %v763 = vadd.f32 0.0, %v762
    %v764 = vpop.f32.mrb[0].mxu0
    %v765 = vadd.f32 0.0, %v764
    %766 = vdwg.mxu0
    %v767 = vadd.f32 %v237, %v763
    %v768 = vadd.f32 %v239, %v765
    %v769 = vxor.u32 %v767, 2147483648
    %v770 = vmul.f32 %v769, 1.442695
    %v771 = vpow.pop %v770
    %v772 = vadd.f32 %v771, 1.0
    %v773 = vrcp.pop %v772
    %v774 = vmul.f32 1.0, %v773
    %v775 = vtanh.pop %v768
    %v776 = vxor.u32 %v768, 2147483648
    %v777 = vmul.f32 %v776, 1.442695
    %v778 = vpow.pop %v777
    %v779 = vadd.f32 %v778, 1.0
    %v780 = vrcp.pop %v779
    %v781 = vmul.f32 1.0, %v780
    %v783 = vrot.slane %v687, 6
    %v785 = vmul.f32 %v774, %v783
    %v786 = vmul.f32 %v774, %v775
    %788 = vrot.lane.b32.xlu0 %v786, 64
    %v789 = vpop.permute.xlu0 %788
    %v791 = vadd.f32 %v785, %v789
    %v792 = vtanh.pop %v791
    %v793 = vmul.f32 %v781, %v792
    %795 = vrot.lane.b32.xlu0 %v793, 64
    %v796 = vpop.permute.xlu0 %795
    %v797 = vsel %vm157, %v796, 0
    %799 = vmatprep.subr.mxu0 %v242
    %800 = vmatpush1.msra.mxu0 %v241
    %801 = vmatprep.subr.mxu0 %v244
    %802 = vmatpush1.msra.mxu0 %v243
    %803 = vmatprep.subr.mxu0 %v246
    %804 = vmatpush1.msra.mxu0 %v245
    %805 = vmatprep.subr.mxu0 %v248
    %806 = vmatpush1.msra.mxu0 %v247
    %807 = vmatprep.subr.mxu0 %v250
    %808 = vmatpush1.msra.mxu0 %v249
    %809 = vmatprep.subr.mxu0 %v252
    %810 = vmatpush1.msra.mxu0 %v251
    %811 = vmatprep.subr.mxu0 %v254
    %812 = vmatpush1.msra.mxu0 %v253
    %813 = vmatprep.subr.mxu0 %v256
    %814 = vmatpush1.msra.mxu0 %v255
    %815 = vmatprep.subr.mxu0 0.0
    %816 = vmatpush1.msra.mxu0 0.0
    %817 = vmatprep.subr.mxu0 0.0
    %818 = vmatpush1.msra.mxu0 0.0
    %819 = vmatprep.subr.mxu0 0.0
    %820 = vmatpush1.msra.mxu0 0.0
    %821 = vmatprep.subr.mxu0 0.0
    %822 = vmatpush1.msra.mxu0 0.0
    %823 = vmatprep.subr.mxu0 0.0
    %824 = vmatpush1.msra.mxu0 0.0
    %825 = vmatprep.subr.mxu0 0.0
    %826 = vmatpush1.msra.mxu0 0.0
    %827 = vmatprep.subr.mxu0 0.0
    %828 = vmatpush1.msra.mxu0 0.0
    %829 = vmatprep.subr.mxu0 0.0
    %830 = vmatpush1.msra.mxu0 0.0
    %831 = vmatprep.subr.mxu0 0.0
    %832 = vmatpush1.msra.mxu0 0.0
    %833 = vmatprep.subr.mxu0 0.0
    %834 = vmatpush1.msra.mxu0 0.0
    %835 = vmatprep.subr.mxu0 0.0
    %836 = vmatpush1.msra.mxu0 0.0
    %837 = vmatprep.subr.mxu0 0.0
    %838 = vmatpush1.msra.mxu0 0.0
    %839 = vmatprep.subr.mxu0 0.0
    %840 = vmatpush1.msra.mxu0 0.0
    %841 = vmatprep.subr.mxu0 0.0
    %842 = vmatpush1.msra.mxu0 0.0
    %843 = vmatprep.subr.mxu0 0.0
    %844 = vmatpush1.msra.mxu0 0.0
    %845 = vmatprep.subr.mxu0 0.0
    %846 = vmatpush1.msra.mxu0 0.0
    %847 = vmatprep.subr.mxu0 0.0
    %848 = vmatpush1.msra.mxu0 0.0
    %849 = vmatprep.subr.mxu0 0.0
    %850 = vmatpush1.msra.mxu0 0.0
    %851 = vmatprep.subr.mxu0 0.0
    %852 = vmatpush1.msra.mxu0 0.0
    %853 = vmatprep.subr.mxu0 0.0
    %854 = vmatpush1.msra.mxu0 0.0
    %855 = vmatprep.subr.mxu0 0.0
    %856 = vmatpush1.msra.mxu0 0.0
    %857 = vmatprep.subr.mxu0 0.0
    %858 = vmatpush1.msra.mxu0 0.0
    %859 = vmatprep.subr.mxu0 0.0
    %860 = vmatpush1.msra.mxu0 0.0
    %861 = vmatprep.subr.mxu0 0.0
    %862 = vmatpush1.msra.mxu0 0.0
    %863 = vmatprep.mubr.f32.mxu0 0.0
    %864 = vmatmul.mubr.f32.gmra.mrb[0].mxu0 %v797
    %v865 = vpop.f32.mrb[0].mxu0
    %v866 = vadd.f32 0.0, %v865
    %v867 = vpop.f32.mrb[0].mxu0
    %v868 = vadd.f32 0.0, %v867
    %869 = vdwg.mxu0
    %v872 = vrot.slane %v866, 6
    %v873 = vrot.slane %v868, 6
    %v876 = vadd.f32 %v237, %v872
    %v877 = vadd.f32 %v239, %v873
    %v878 = vxor.u32 %v876, 2147483648
    %v879 = vmul.f32 %v878, 1.442695
    %v880 = vpow.pop %v879
    %v881 = vadd.f32 %v880, 1.0
    %v882 = vrcp.pop %v881
    %v883 = vmul.f32 1.0, %v882
    %v884 = vtanh.pop %v877
    %v885 = vxor.u32 %v877, 2147483648
    %v886 = vmul.f32 %v885, 1.442695
    %v887 = vpow.pop %v886
    %v888 = vadd.f32 %v887, 1.0
    %v889 = vrcp.pop %v888
    %v890 = vmul.f32 1.0, %v889
    %v892 = vrot.slane %v791, 6
    %v894 = vmul.f32 %v883, %v892
    %v895 = vmul.f32 %v883, %v884
    %897 = vrot.lane.b32.xlu0 %v895, 64
    %v898 = vpop.permute.xlu0 %897
    %v900 = vadd.f32 %v894, %v898
    %v901 = vtanh.pop %v900
    %v902 = vmul.f32 %v890, %v901
    %v904 = vrot.slane %v902, 2
    %905 = vrot.lane.b32.xlu0 %v904, 64
    %v906 = vpop.permute.xlu0 %905
    %v907 = vsel %vm157, %v906, 0
    %909 = vmatprep.subr.mxu0 %v242
    %910 = vmatpush1.msra.mxu0 %v241
    %911 = vmatprep.subr.mxu0 %v244
    %912 = vmatpush1.msra.mxu0 %v243
    %913 = vmatprep.subr.mxu0 %v246
    %914 = vmatpush1.msra.mxu0 %v245
    %915 = vmatprep.subr.mxu0 %v248
    %916 = vmatpush1.msra.mxu0 %v247
    %917 = vmatprep.subr.mxu0 %v250
    %918 = vmatpush1.msra.mxu0 %v249
    %919 = vmatprep.subr.mxu0 %v252
    %920 = vmatpush1.msra.mxu0 %v251
    %921 = vmatprep.subr.mxu0 %v254
    %922 = vmatpush1.msra.mxu0 %v253
    %923 = vmatprep.subr.mxu0 %v256
    %924 = vmatpush1.msra.mxu0 %v255
    %925 = vmatprep.subr.mxu0 0.0
    %926 = vmatpush1.msra.mxu0 0.0
    %927 = vmatprep.subr.mxu0 0.0
    %928 = vmatpush1.msra.mxu0 0.0
    %929 = vmatprep.subr.mxu0 0.0
    %930 = vmatpush1.msra.mxu0 0.0
    %931 = vmatprep.subr.mxu0 0.0
    %932 = vmatpush1.msra.mxu0 0.0
    %933 = vmatprep.subr.mxu0 0.0
    %934 = vmatpush1.msra.mxu0 0.0
    %935 = vmatprep.subr.mxu0 0.0
    %936 = vmatpush1.msra.mxu0 0.0
    %937 = vmatprep.subr.mxu0 0.0
    %938 = vmatpush1.msra.mxu0 0.0
    %939 = vmatprep.subr.mxu0 0.0
    %940 = vmatpush1.msra.mxu0 0.0
    %941 = vmatprep.subr.mxu0 0.0
    %942 = vmatpush1.msra.mxu0 0.0
    %943 = vmatprep.subr.mxu0 0.0
    %944 = vmatpush1.msra.mxu0 0.0
    %945 = vmatprep.subr.mxu0 0.0
    %946 = vmatpush1.msra.mxu0 0.0
    %947 = vmatprep.subr.mxu0 0.0
    %948 = vmatpush1.msra.mxu0 0.0
    %949 = vmatprep.subr.mxu0 0.0
    %950 = vmatpush1.msra.mxu0 0.0
    %951 = vmatprep.subr.mxu0 0.0
    %952 = vmatpush1.msra.mxu0 0.0
    %953 = vmatprep.subr.mxu0 0.0
    %954 = vmatpush1.msra.mxu0 0.0
    %955 = vmatprep.subr.mxu0 0.0
    %956 = vmatpush1.msra.mxu0 0.0
    %957 = vmatprep.subr.mxu0 0.0
    %958 = vmatpush1.msra.mxu0 0.0
    %959 = vmatprep.subr.mxu0 0.0
    %960 = vmatpush1.msra.mxu0 0.0
    %961 = vmatprep.subr.mxu0 0.0
    %962 = vmatpush1.msra.mxu0 0.0
    %963 = vmatprep.subr.mxu0 0.0
    %964 = vmatpush1.msra.mxu0 0.0
    %965 = vmatprep.subr.mxu0 0.0
    %966 = vmatpush1.msra.mxu0 0.0
    %967 = vmatprep.subr.mxu0 0.0
    %968 = vmatpush1.msra.mxu0 0.0
    %969 = vmatprep.subr.mxu0 0.0
    %970 = vmatpush1.msra.mxu0 0.0
    %971 = vmatprep.subr.mxu0 0.0
    %972 = vmatpush1.msra.mxu0 0.0
    %973 = vmatprep.mubr.f32.mxu0 0.0
    %974 = vmatmul.mubr.f32.gmra.mrb[0].mxu0 %v907
    %v975 = vpop.f32.mrb[0].mxu0
    %v976 = vadd.f32 0.0, %v975
    %v977 = vpop.f32.mrb[0].mxu0
    %v978 = vadd.f32 0.0, %v977
    %979 = vdwg.mxu0
    %v982 = vrot.slane %v976, 4
    %v983 = vrot.slane %v978, 4
    %v986 = vadd.f32 %v237, %v982
    %v987 = vadd.f32 %v239, %v983
    %v988 = vxor.u32 %v986, 2147483648
    %v989 = vmul.f32 %v988, 1.442695
    %v990 = vpow.pop %v989
    %v991 = vadd.f32 %v990, 1.0
    %v992 = vrcp.pop %v991
    %v993 = vmul.f32 1.0, %v992
    %v994 = vtanh.pop %v987
    %v995 = vxor.u32 %v987, 2147483648
    %v996 = vmul.f32 %v995, 1.442695
    %v997 = vpow.pop %v996
    %v998 = vadd.f32 %v997, 1.0
    %v999 = vrcp.pop %v998
    %v1000 = vmul.f32 1.0, %v999
    %v1002 = vrot.slane %v900, 6
    %v1004 = vmul.f32 %v993, %v1002
    %v1005 = vmul.f32 %v993, %v994
    %1007 = vrot.lane.b32.xlu0 %v1005, 64
    %v1008 = vpop.permute.xlu0 %1007
    %v1010 = vadd.f32 %v1004, %v1008
    %v1011 = vtanh.pop %v1010
    %v1012 = vmul.f32 %v1000, %v1011
    %v1014 = vrot.slane %v1012, 4
    %1015 = vrot.lane.b32.xlu0 %v1014, 64
    %v1016 = vpop.permute.xlu0 %1015
    %v1017 = vsel %vm157, %v1016, 0
    %1019 = vmatprep.subr.mxu0 %v242
    %1020 = vmatpush1.msra.mxu0 %v241
    %1021 = vmatprep.subr.mxu0 %v244
    %1022 = vmatpush1.msra.mxu0 %v243
    %1023 = vmatprep.subr.mxu0 %v246
    %1024 = vmatpush1.msra.mxu0 %v245
    %1025 = vmatprep.subr.mxu0 %v248
    %1026 = vmatpush1.msra.mxu0 %v247
    %1027 = vmatprep.subr.mxu0 %v250
    %1028 = vmatpush1.msra.mxu0 %v249
    %1029 = vmatprep.subr.mxu0 %v252
    %1030 = vmatpush1.msra.mxu0 %v251
    %1031 = vmatprep.subr.mxu0 %v254
    %1032 = vmatpush1.msra.mxu0 %v253
    %1033 = vmatprep.subr.mxu0 %v256
    %1034 = vmatpush1.msra.mxu0 %v255
    %1035 = vmatprep.subr.mxu0 0.0
    %1036 = vmatpush1.msra.mxu0 0.0
    %1037 = vmatprep.subr.mxu0 0.0
    %1038 = vmatpush1.msra.mxu0 0.0
    %1039 = vmatprep.subr.mxu0 0.0
    %1040 = vmatpush1.msra.mxu0 0.0
    %1041 = vmatprep.subr.mxu0 0.0
    %1042 = vmatpush1.msra.mxu0 0.0
    %1043 = vmatprep.subr.mxu0 0.0
    %1044 = vmatpush1.msra.mxu0 0.0
    %1045 = vmatprep.subr.mxu0 0.0
    %1046 = vmatpush1.msra.mxu0 0.0
    %1047 = vmatprep.subr.mxu0 0.0
    %1048 = vmatpush1.msra.mxu0 0.0
    %1049 = vmatprep.subr.mxu0 0.0
    %1050 = vmatpush1.msra.mxu0 0.0
    %1051 = vmatprep.subr.mxu0 0.0
    %1052 = vmatpush1.msra.mxu0 0.0
    %1053 = vmatprep.subr.mxu0 0.0
    %1054 = vmatpush1.msra.mxu0 0.0
    %1055 = vmatprep.subr.mxu0 0.0
    %1056 = vmatpush1.msra.mxu0 0.0
    %1057 = vmatprep.subr.mxu0 0.0
    %1058 = vmatpush1.msra.mxu0 0.0
    %1059 = vmatprep.subr.mxu0 0.0
    %1060 = vmatpush1.msra.mxu0 0.0
    %1061 = vmatprep.subr.mxu0 0.0
    %1062 = vmatpush1.msra.mxu0 0.0
    %1063 = vmatprep.subr.mxu0 0.0
    %1064 = vmatpush1.msra.mxu0 0.0
    %1065 = vmatprep.subr.mxu0 0.0
    %1066 = vmatpush1.msra.mxu0 0.0
    %1067 = vmatprep.subr.mxu0 0.0
    %1068 = vmatpush1.msra.mxu0 0.0
    %1069 = vmatprep.subr.mxu0 0.0
    %1070 = vmatpush1.msra.mxu0 0.0
    %1071 = vmatprep.subr.mxu0 0.0
    %1072 = vmatpush1.msra.mxu0 0.0
    %1073 = vmatprep.subr.mxu0 0.0
    %1074 = vmatpush1.msra.mxu0 0.0
    %1075 = vmatprep.subr.mxu0 0.0
    %1076 = vmatpush1.msra.mxu0 0.0
    %1077 = vmatprep.subr.mxu0 0.0
    %1078 = vmatpush1.msra.mxu0 0.0
    %1079 = vmatprep.subr.mxu0 0.0
    %1080 = vmatpush1.msra.mxu0 0.0
    %1081 = vmatprep.subr.mxu0 0.0
    %1082 = vmatpush1.msra.mxu0 0.0
    %1083 = vmatprep.mubr.f32.mxu0 0.0
    %1084 = vmatmul.mubr.f32.gmra.mrb[0].mxu0 %v1017
    %v1085 = vpop.f32.mrb[0].mxu0
    %v1086 = vadd.f32 0.0, %v1085
    %v1087 = vpop.f32.mrb[0].mxu0
    %v1088 = vadd.f32 0.0, %v1087
    %1089 = vdwg.mxu0
    %v1092 = vrot.slane %v1086, 2
    %v1093 = vrot.slane %v1088, 2
    %v1096 = vadd.f32 %v237, %v1092
    %v1097 = vadd.f32 %v239, %v1093
    %v1098 = vxor.u32 %v1096, 2147483648
    %v1099 = vmul.f32 %v1098, 1.442695
    %v1100 = vpow.pop %v1099
    %v1101 = vadd.f32 %v1100, 1.0
    %v1102 = vrcp.pop %v1101
    %v1103 = vmul.f32 1.0, %v1102
    %v1104 = vtanh.pop %v1097
    %v1105 = vxor.u32 %v1097, 2147483648
    %v1106 = vmul.f32 %v1105, 1.442695
    %v1107 = vpow.pop %v1106
    %v1108 = vadd.f32 %v1107, 1.0
    %v1109 = vrcp.pop %v1108
    %v1110 = vmul.f32 1.0, %v1109
    %v1112 = vrot.slane %v1010, 6
    %v1114 = vmul.f32 %v1103, %v1112
    %v1115 = vmul.f32 %v1103, %v1104
    %1117 = vrot.lane.b32.xlu0 %v1115, 64
    %v1118 = vpop.permute.xlu0 %1117
    %v1120 = vadd.f32 %v1114, %v1118
    %v1121 = vtanh.pop %v1120
    %v1122 = vmul.f32 %v1110, %v1121
    %vm1123 = vcmask 1041408
    %v1124 = vsel %vm1123, %v360, %v469
    %v1125 = vsel %vm47, %v1124, %v579
    %vm1126 = vcmask 1045504
    %v1127 = vsel %vm1126, %v1125, %v689
    %v1128 = vsel %vm1123, %v793, %v902
    %v1129 = vsel %vm47, %v1128, %v1012
    %v1130 = vsel %vm1126, %v1129, %v1122
    %v1131 = vld [vmem:[#allocation2 + $0x130] sm:$0xff]
    %v1132 = vld [vmem:[#allocation2 + $0x140] sm:$0xff]
    %v1133 = vld [vmem:[#allocation2 + $0x150] sm:$0xff]
    %v1134 = vld [vmem:[#allocation2 + $0x160] sm:$0xff]
    %v1135 = vld [vmem:[#allocation2 + $0x170] sm:$0xff]
    %v1136 = vld [vmem:[#allocation2 + $0x180] sm:$0xff]
    %v1137 = vld [vmem:[#allocation2 + $0x190] sm:$0xff]
    %v1138 = vld [vmem:[#allocation2 + $0x1a0] sm:$0xff]
    %v1139 = vld [vmem:[#allocation2 + $0x1b0] ss:$0 sm:$0xff]
    %1142 = vrot.lane.b32.xlu0 %v1127, 64
    %v1143 = vpop.permute.xlu0 %1142
    %1144 = vrot.lane.b32.xlu0 %v1130, 64
    %v1145 = vpop.permute.xlu0 %1144
    %v1146 = vsel %vm157, %v1143, 0
    %v1148 = vsel %vm157, %v1145, 0
    %1150 = vmatprep.subr.mxu0 0.0
    %1151 = vmatpush1.msra.mxu0 %v1131
    %1152 = vmatprep.subr.mxu0 0.0
    %1153 = vmatpush1.msra.mxu0 %v1132
    %1154 = vmatprep.subr.mxu0 0.0
    %1155 = vmatpush1.msra.mxu0 %v1133
    %1156 = vmatprep.subr.mxu0 0.0
    %1157 = vmatpush1.msra.mxu0 %v1134
    %1158 = vmatprep.subr.mxu0 0.0
    %1159 = vmatpush1.msra.mxu0 %v1135
    %1160 = vmatprep.subr.mxu0 0.0
    %1161 = vmatpush1.msra.mxu0 %v1136
    %1162 = vmatprep.subr.mxu0 0.0
    %1163 = vmatpush1.msra.mxu0 %v1137
    %1164 = vmatprep.subr.mxu0 0.0
    %1165 = vmatpush1.msra.mxu0 %v1138
    %1166 = vmatprep.subr.mxu0 0.0
    %1167 = vmatpush1.msra.mxu0 0.0
    %1168 = vmatprep.subr.mxu0 0.0
    %1169 = vmatpush1.msra.mxu0 0.0
    %1170 = vmatprep.subr.mxu0 0.0
    %1171 = vmatpush1.msra.mxu0 0.0
    %1172 = vmatprep.subr.mxu0 0.0
    %1173 = vmatpush1.msra.mxu0 0.0
    %1174 = vmatprep.subr.mxu0 0.0
    %1175 = vmatpush1.msra.mxu0 0.0
    %1176 = vmatprep.subr.mxu0 0.0
    %1177 = vmatpush1.msra.mxu0 0.0
    %1178 = vmatprep.subr.mxu0 0.0
    %1179 = vmatpush1.msra.mxu0 0.0
    %1180 = vmatprep.subr.mxu0 0.0
    %1181 = vmatpush1.msra.mxu0 0.0
    %1182 = vmatprep.subr.mxu0 0.0
    %1183 = vmatpush1.msra.mxu0 0.0
    %1184 = vmatprep.subr.mxu0 0.0
    %1185 = vmatpush1.msra.mxu0 0.0
    %1186 = vmatprep.subr.mxu0 0.0
    %1187 = vmatpush1.msra.mxu0 0.0
    %1188 = vmatprep.subr.mxu0 0.0
    %1189 = vmatpush1.msra.mxu0 0.0
    %1190 = vmatprep.subr.mxu0 0.0
    %1191 = vmatpush1.msra.mxu0 0.0
    %1192 = vmatprep.subr.mxu0 0.0
    %1193 = vmatpush1.msra.mxu0 0.0
    %1194 = vmatprep.subr.mxu0 0.0
    %1195 = vmatpush1.msra.mxu0 0.0
    %1196 = vmatprep.subr.mxu0 0.0
    %1197 = vmatpush1.msra.mxu0 0.0
    %1198 = vmatprep.subr.mxu0 0.0
    %1199 = vmatpush1.msra.mxu0 0.0
    %1200 = vmatprep.subr.mxu0 0.0
    %1201 = vmatpush1.msra.mxu0 0.0
    %1202 = vmatprep.subr.mxu0 0.0
    %1203 = vmatpush1.msra.mxu0 0.0
    %1204 = vmatprep.subr.mxu0 0.0
    %1205 = vmatpush1.msra.mxu0 0.0
    %1206 = vmatprep.subr.mxu0 0.0
    %1207 = vmatpush1.msra.mxu0 0.0
    %1208 = vmatprep.subr.mxu0 0.0
    %1209 = vmatpush1.msra.mxu0 0.0
    %1210 = vmatprep.subr.mxu0 0.0
    %1211 = vmatpush1.msra.mxu0 0.0
    %1212 = vmatprep.subr.mxu0 0.0
    %1213 = vmatpush1.msra.mxu0 0.0
    %1214 = vmatprep.mubr.f32.mxu0 0.0
    %1215 = vmatmul.mubr.f32.gmra.mrb[0].mxu0 %v1146
    %v1216 = vpop.f32.mrb[0].mxu0
    %v1217 = vadd.f32 %v1139, %v1216
    %v1218 = vpop.f32.mrb[0].mxu0
    %1219 = vmatprep.mubr.f32.mxu0 0.0
    %1220 = vmatmul.mubr.f32.gmra.mrb[0].mxu0 %v1148
    %v1221 = vpop.f32.mrb[0].mxu0
    %v1222 = vadd.f32 %v1139, %v1221
    %v1223 = vpop.f32.mrb[0].mxu0
    %1224 = vdwg.mxu0
    %vm1225 = vcmask 15360
    %1226 = vst.msk [vmem:[%s4] sm:$0xff] %vm1225, %v1217
    %1227 = vst.msk [vmem:[%s4 + $0x8] sm:$0xff] %vm1225, %v1222
    %1229 = vrot.lane.b32.xlu0 %v1122, 64
    %v1230 = vpop.permute.xlu0 %1229
    %vm1232 = vcmask 523270
    %1233 = vst.msk [vmem:[#allocation5 - $0x6] sm:$0xc0] %vm1232, %v1230
    %1235 = vrot.lane.b32.xlu0 %v1120, 64
    %v1236 = vpop.permute.xlu0 %1235
    %1238 = vst.msk [vmem:[#allocation6 - $0x6] sm:$0xc0] %vm1232, %v1236
    // Predicated region
    $region22: #{qnet_forward.1} parent=1 // pred_check
      _
    $region23: #{qnet_forward.1} parent=1 // pred_check_branch
      %1240 = sbr.rel (0) target = $region25
    $region24: #{qnet_forward.1} parent=1 // pred_region
      _
    $region25: #{qnet_forward.1} parent=1 // pred_fallthru
      _
    // Predicated region
    $region26: #{qnet_forward.1} parent=1 // pred_check
      _
    $region27: #{qnet_forward.1} parent=1 // pred_check_branch
      %1242 = sbr.rel (0) target = $region29
    $region28: #{qnet_forward.1} parent=1 // pred_region
      %s1244 = ssub.s32 32, 32
      %1245 = vsyncadd [#allocation4], %s1244
      %s1247 = sshll.u32 [#allocation5], 4
      %s1248 = int_to_ptr.vmem [resolvable:$true] %s1247
      %1250 = dma.vmem_to_hbm [thread:$0]  %s1248, 32, %s5, [#allocation4]
    $region29: #{qnet_forward.1} parent=1 // pred_fallthru
      _
    // Predicated region
    $region30: #{qnet_forward.1} parent=1 // pred_check
      _
    $region31: #{qnet_forward.1} parent=1 // pred_check_branch
      %1252 = sbr.rel (0) target = $region33
    $region32: #{qnet_forward.1} parent=1 // pred_region
      %s1254 = ssub.s32 32, 32
      %1255 = vsyncadd [#allocation7], %s1254
      %s1257 = sshll.u32 [#allocation6], 4
      %s1258 = int_to_ptr.vmem [resolvable:$true] %s1257
      %1260 = dma.vmem_to_hbm [thread:$0]  %s1258, 32, %s6, [#allocation7]
    $region33: #{qnet_forward.1} parent=1 // pred_fallthru
      _
    // Predicated region
    $region34: #{qnet_forward.1} parent=1 // pred_check
      _
    $region35: #{qnet_forward.1} parent=1 // pred_check_branch
      %1262 = sbr.rel (0) target = $region37
    $region36: #{qnet_forward.1} parent=1 // pred_region
      _
    $region37: #{qnet_forward.1} parent=1 // pred_fallthru
      _
    // Predicated region
    $region38: #{qnet_forward.1} parent=1 // pred_check
      _
    $region39: #{qnet_forward.1} parent=1 // pred_check_branch
      %1264 = sbr.rel (0) target = $region41
    $region40: #{qnet_forward.1} parent=1 // pred_region
      %1265 = dma.done [#allocation4], 32
    $region41: #{qnet_forward.1} parent=1 // pred_fallthru
      _
    // Predicated region
    $region42: #{qnet_forward.1} parent=1 // pred_check
      _
    $region43: #{qnet_forward.1} parent=1 // pred_check_branch
      %1267 = sbr.rel (0) target = $region45
    $region44: #{qnet_forward.1} parent=1 // pred_region
      %1268 = dma.done [#allocation7], 32
    $region45: #{qnet_forward.1} parent=1 // pred_fallthru
      _
    %1269 = vsyncpa [#allocation3], 1
    %1270 = vsyncpa [#allocation4], 1
    %1271 = vsyncpa [#allocation7], 1

</llo_original>
